<compile_context>
chip_gen: v6e
topology: v6e:2x2x1
jax: 0.10.0
libtpu: 0.0.40
codegen_flags: <defaults>
</compile_context>

<pallas_src>
import functools

import jax
import jax.numpy as jnp
from jax import lax
from jax.experimental import pallas as pl
from jax.experimental.pallas import tpu as pltpu

_LANE = 128


def _round_up(x, m):
    return ((x + m - 1) // m) * m


# ----------------------------------------------------------------------------
# Kernel 1 (fused): per row-tile
#   feat   = x @ w_embed + b_embed          (bf16 MXU operands, f32 accumulate)
#   logits = bf16(feat) @ w_head_inst + b   (rides in the MXU shadow of the embed matmul)
# emits feat in bf16 (the only dtype it is ever consumed in) and logits in f32.
# ----------------------------------------------------------------------------
def _embed_head_kernel(x_ref, we_ref, be_ref, wh_ref, bh_ref, feat_ref, logit_ref):
    acc = jnp.dot(x_ref[...], we_ref[...], preferred_element_type=jnp.float32)
    feat_bf = (acc + be_ref[...]).astype(jnp.bfloat16)
    feat_ref[...] = feat_bf
    logit_ref[...] = (
        jnp.dot(feat_bf, wh_ref[...], preferred_element_type=jnp.float32) + bh_ref[...]
    )


def embed_head_pallas(x, we, be, whi, bhi, *, tm=512):
    """x[M, Din] -> (feat[M, Dp] bf16, logits_inst[M, Kip] f32).

    * rows tiled with tm=512 (clamped to a 256-multiple for small M), last tile zero-padded.
    * weight/bias operands arrive pre-padded (lane-dense Dp / Kip) and pre-cast from
      prepare_params(); no per-call pad/convert traffic.
    * Din is small so no K-reduction grid axis is needed; for large Din add a third
      "arbitrary" axis with a VMEM accumulator.
    """
    M, Din = x.shape
    Dp = we.shape[1]
    Kip = whi.shape[1]
    tm = min(tm, _round_up(M, 256))
    M_p = _round_up(M, tm)

    x_p = x.astype(jnp.bfloat16)
    if M_p != M:
        x_p = jnp.pad(x_p, ((0, M_p - M), (0, 0)))

    feat, logit = pl.pallas_call(
        _embed_head_kernel,
        out_shape=(
            jax.ShapeDtypeStruct((M_p, Dp), jnp.bfloat16),
            jax.ShapeDtypeStruct((M_p, Kip), jnp.float32),
        ),
        grid_spec=pltpu.PrefetchScalarGridSpec(
            num_scalar_prefetch=0,
            grid=(M_p // tm,),
            in_specs=[
                pl.BlockSpec((tm, Din), lambda i: (i, 0)),
                pl.BlockSpec((Din, Dp), lambda i: (0, 0)),
                pl.BlockSpec((1, Dp), lambda i: (0, 0)),
                pl.BlockSpec((Dp, Kip), lambda i: (0, 0)),
                pl.BlockSpec((1, Kip), lambda i: (0, 0)),
            ],
            out_specs=[
                pl.BlockSpec((tm, Dp), lambda i: (i, 0)),
                pl.BlockSpec((tm, Kip), lambda i: (i, 0)),
            ],
        ),
        compiler_params=pltpu.CompilerParams(
            dimension_semantics=("parallel",),
            vmem_limit_bytes=64 * 1024 * 1024,
        ),
    )(x_p, we, be, whi, bhi)
    return feat[:M], logit[:M]


# ----------------------------------------------------------------------------
# Kernel 2 (fused per-bag tail), grid=(B,):
#   nearest-center assignment -> per-cluster masked mean pool -> head linear
#   -> softmax score -> per-bag argmax cluster -> that cluster's logits.
#   Centers are (by construction) the first Cc rows of the bag's feats block, so
#   there is no separate centers input.  All intermediates stay in VMEM.
# ----------------------------------------------------------------------------
def _bag_kernel(f_ref, w_ref, b_ref, o_ref, *, num_cluster, nor_index):
    # f_ref: (1, N, Dp) bf16, w_ref: (Dp, K) f32, b_ref: (1, K) f32, o_ref: (1, 1, K) f32
    f_bf = f_ref[0]                                                  # (N, Dp)
    Cc = num_cluster
    N = f_bf.shape[0]
    cen_bf = f_bf[:Cc, :]                                            # (Cc, Dp)
    cen = cen_bf.astype(jnp.float32)

    # --- kmeans-style nearest-center assignment (argmin squared euclidean) ---
    # |f - c|^2 = |f|^2 - 2 f.c + |c|^2 ; the |f|^2 term is constant per instance and
    # therefore dropped (does not affect the per-instance argmin over clusters).
    # NOTE: cross is computed from bf16 operands (f32 accumulation); near-exact ties vs an
    # f32 torch.cdist reference may flip, but centers here are a deterministic stand-in.
    cross = lax.dot_general(cen_bf, f_bf, (((1,), (1,)), ((), ())),
                            preferred_element_type=jnp.float32)      # (Cc, N)
    c2 = jnp.sum(cen * cen, axis=-1, keepdims=True)                  # (Cc, 1)
    d2 = c2 - 2.0 * cross                                            # (Cc, N)
    mind = jnp.min(d2, axis=0, keepdims=True)                        # (1, N)
    iota_cn = lax.broadcasted_iota(jnp.int32, (Cc, N), 0)
    idx = jnp.min(jnp.where(d2 <= mind, iota_cn, Cc),
                  axis=0, keepdims=True)                             # first-min tie-break
    mask = (iota_cn == idx).astype(jnp.float32)                      # (Cc, N) one-hot

    # --- per-(bag, cluster) masked mean pooling (AdaptiveAvgPool1d(1)) ---
    s = lax.dot_general(mask.astype(f_bf.dtype), f_bf, (((1,), (0,)), ((), ())),
                        preferred_element_type=jnp.float32)          # (Cc, Dp)
    cnt = jnp.sum(mask, axis=1, keepdims=True)                       # (Cc, 1) lane reduce
    pooled = s / jnp.maximum(cnt, 1.0)                               # exact divide (returned path)

    # --- head(pooled) -> per-cluster logits ---
    logits = jnp.dot(pooled, w_ref[...],
                     preferred_element_type=jnp.float32) + b_ref[...]  # (Cc, K)

    # --- softmax score + per-bag argmax cluster selection (training path) ---
    z = logits - jnp.max(logits, axis=-1, keepdims=True)
    e = jnp.exp(z)
    # approx reciprocal is fine here: p is only used to pick the argmax cluster.
    p = e * pl.reciprocal(jnp.sum(e, axis=-1, keepdims=True), approx=True)
    if nor_index < 0:
        score = jnp.max(p, axis=-1, keepdims=True)                   # (Cc, 1)
    else:
        score = 1.0 - p[:, nor_index:nor_index + 1]                  # (Cc, 1)
    ms = jnp.max(score, axis=0, keepdims=True)                       # (1, 1)
    iota_c = lax.broadcasted_iota(jnp.int32, (Cc, 1), 0)
    sel = jnp.min(jnp.where(score >= ms, iota_c, Cc),
                  axis=0, keepdims=True)                             # first-max tie-break
    onehot = (iota_c == sel).astype(jnp.float32)                     # (Cc, 1)
    o_ref[0] = jnp.sum(onehot * logits, axis=0, keepdims=True)       # (1, K)


def cluster_bag_pallas(feats, w_head, b_head, *, num_cluster, nor_index):
    """feats[B,N,Dp] (bf16) -> logits_bag[B,K] (selected cluster's head logits)."""
    B, N, Dp = feats.shape
    K = w_head.shape[1]
    # TODO(synk): for production N (e.g. 4k instances, D=768) on v7x (64 MiB VMEM), add an
    # inner "arbitrary" N-tile grid axis accumulating the (Cc,Dp) pooled sum and (Cc,1)
    # counts in VMEM scratch (P3 pattern), keeping B as the outer "parallel" axis; at these
    # shapes the whole bag fits comfortably under the explicit vmem_limit below.
    out = pl.pallas_call(
        functools.partial(_bag_kernel, num_cluster=num_cluster, nor_index=nor_index),
        out_shape=jax.ShapeDtypeStruct((B, 1, K), jnp.float32),
        grid_spec=pltpu.PrefetchScalarGridSpec(
            num_scalar_prefetch=0,
            grid=(B,),
            in_specs=[
                pl.BlockSpec((1, N, Dp), lambda b: (b, 0, 0)),
                pl.BlockSpec((Dp, K), lambda b: (0, 0)),
                pl.BlockSpec((1, K), lambda b: (0, 0)),
            ],
            out_specs=pl.BlockSpec((1, 1, K), lambda b: (b, 0, 0)),
        ),
        compiler_params=pltpu.CompilerParams(
            dimension_semantics=("parallel",),
            vmem_limit_bytes=64 * 1024 * 1024,
        ),
    )(feats, w_head, b_head)
    return out.reshape(B, K)


# ----------------------------------------------------------------------------
# One-time parameter prep: padding to lane-dense widths + dtype casts, hoisted
# out of the per-forward jit so no pad/convert XLA ops run per step.
# ----------------------------------------------------------------------------
def prepare_params(params):
    w_embed = params["w_embed"]
    Din, D = w_embed.shape
    Dp = _round_up(D, _LANE)
    Kinst = params["w_head_inst"].shape[1]
    Kip = _round_up(Kinst, _LANE)

    prepped = {
        "we": jnp.pad(w_embed, ((0, 0), (0, Dp - D))).astype(jnp.bfloat16),
        "be": jnp.pad(params["b_embed"].reshape(1, D),
                      ((0, 0), (0, Dp - D))).astype(jnp.float32),
        "whi": jnp.pad(params["w_head_inst"],
                       ((0, Dp - D), (0, Kip - Kinst))).astype(jnp.bfloat16),
        "bhi": jnp.pad(params["b_head_inst"].reshape(1, Kinst),
                       ((0, 0), (0, Kip - Kinst))).astype(jnp.float32),
        "wh": jnp.pad(params["w_head"], ((0, Dp - D), (0, 0))).astype(jnp.float32),
        "bh": params["b_head"].reshape(1, -1).astype(jnp.float32),
    }
    return prepped


# ----------------------------------------------------------------------------
# Full forward (RddTransformer.forward, kmeans branch, training mode)
# ----------------------------------------------------------------------------
def _extract_patches(x, patch):
    # TODO(synk): the real backbone (forward_features) is an external, unspecified nn.Module;
    # a non-overlapping patch flatten + linear embed is used as a stand-in.  For a production
    # backbone this gather would be folded into the embed kernel's index_map instead of
    # materializing the transposed copy (P=4 blocks violate the (8,128) tiling).
    B, C, H, W = x.shape
    P = patch
    nH, nW = H // P, W // P
    p = x.reshape(B, C, nH, P, nW, P)
    p = jnp.transpose(p, (0, 2, 4, 1, 3, 5)).reshape(B, nH * nW, C * P * P)
    return p


@functools.partial(jax.jit,
                   static_argnames=("patch", "num_cluster", "nor_index", "ins_num_classes"))
def _forward_arrays(x, prepped, *, patch, num_cluster, nor_index, ins_num_classes):
    B = x.shape[0]
    patches = _extract_patches(x, patch)                 # (B, N, Din)
    _, N, Din = patches.shape
    Dp = prepped["we"].shape[1]

    # --- fused backbone-embed + head_instance: one HBM pass over the instance path ---
    feat_bf, logits_inst_p = embed_head_pallas(
        patches.reshape(B * N, Din),
        prepped["we"], prepped["be"], prepped["whi"], prepped["bhi"])
    inst_feature = feat_bf.reshape(B, N, Dp)             # bf16, written once, consumed as-is
    logits_inst = logits_inst_p[:, :ins_num_classes].reshape(B, N, ins_num_classes)

    # --- sklearn_cluster (kmeans) stand-in ---
    # TODO(synk): kmeans is an external library call; nearest-center assignment with
    # deterministic centers (the first `num_cluster` instances of each bag, taken inside the
    # bag kernel) is used instead, guaranteeing every cluster is non-empty for the
    # static-shape training path.

    # --- fused cluster_classifier tail: assign -> pool -> head -> softmax-select ---
    logits_bag = cluster_bag_pallas(
        inst_feature, prepped["wh"], prepped["bh"],
        num_cluster=num_cluster, nor_index=nor_index)

    return logits_bag, logits_inst


def rdd_transformer_forward(x, prepped, *, patch, num_cluster, nor_index, ins_num_classes):
    logits_bag, logits_inst = _forward_arrays(
        x, prepped, patch=patch, num_cluster=num_cluster, nor_index=nor_index,
        ins_num_classes=ins_num_classes)
    clusters_num = [num_cluster] * x.shape[0]
    return logits_bag, logits_inst, clusters_num


if __name__ == "__main__":
    # small shapes consistent with the module (dim is a constructor arg; 128 keeps lanes dense)
    B, C_IN, H, W = 2, 3, 16, 16
    PATCH = 4
    DIM = 128
    NUM_CLUSTER = 4
    NUM_CLASSES = 2
    INS_NUM_CLASSES = 3
    NOR_INDEX = -1  # kwargs['nor_index'] < 0 -> score = max softmax prob

    key = jax.random.PRNGKey(0)
    x = jax.random.normal(key, (B, C_IN, H, W), dtype=jnp.float32)

    # deterministic parameter init (initialize_weights stand-in: N(0, 0.02), zero bias)
    pkey = jax.random.PRNGKey(1)
    k1, k2, k3 = jax.random.split(pkey, 3)
    DIN_PATCH = C_IN * PATCH * PATCH
    params = {
        "w_embed": 0.02 * jax.random.normal(k1, (DIN_PATCH, DIM), dtype=jnp.float32),
        "b_embed": jnp.zeros((DIM,), jnp.float32),
        "w_head_inst": 0.02 * jax.random.normal(k2, (DIM, INS_NUM_CLASSES), dtype=jnp.float32),
        "b_head_inst": jnp.zeros((INS_NUM_CLASSES,), jnp.float32),
        "w_head": 0.02 * jax.random.normal(k3, (DIM, NUM_CLASSES), dtype=jnp.float32),
        "b_head": jnp.zeros((NUM_CLASSES,), jnp.float32),
    }

    prepped = prepare_params(params)   # one-time pad/cast, outside the per-step jit
    logits_bag, logits_inst, clusters_num = rdd_transformer_forward(
        x, prepped, patch=PATCH, num_cluster=NUM_CLUSTER, nor_index=NOR_INDEX,
        ins_num_classes=INS_NUM_CLASSES)
    jax.block_until_ready((logits_bag, logits_inst))

    N = (H // PATCH) * (W // PATCH)
    assert logits_bag.shape == (B, NUM_CLASSES)
    assert logits_inst.shape == (B, N, INS_NUM_CLASSES)
    assert bool(jnp.all(jnp.isfinite(logits_bag))) and bool(jnp.all(jnp.isfinite(logits_inst)))
    assert clusters_num == [NUM_CLUSTER] * B
    print("KERNEL_OK")
</pallas_src>

<mosaic_0001>
module attributes {stable_mosaic.version = 11 : i64} {
  func.func @_embed_head_kernel(%arg0: i32, %arg1: memref<256x48xbf16, #tpu.memory_space<vmem>>, %arg2: memref<48x128xbf16, #tpu.memory_space<vmem>>, %arg3: memref<1x128xf32, #tpu.memory_space<vmem>>, %arg4: memref<128x128xbf16, #tpu.memory_space<vmem>>, %arg5: memref<1x128xf32, #tpu.memory_space<vmem>>, %arg6: memref<256x128xbf16, #tpu.memory_space<vmem>>, %arg7: memref<256x128xf32, #tpu.memory_space<vmem>>) attributes {dimension_semantics = [#tpu.dimension_semantics<parallel>], iteration_bounds = array<i64: 1>, scalar_prefetch = 0 : i64, scratch_operands = 0 : i64, tpu.core_type = #tpu.core_type<tc>, window_params = [{transform_indices = @transform_0, window_bounds = array<i64: 256, 48>}, {pipeline_mode = #tpu.pipeline_mode<synchronous>, transform_indices = @transform_1, window_bounds = array<i64: 48, 128>}, {pipeline_mode = #tpu.pipeline_mode<synchronous>, transform_indices = @transform_2, window_bounds = array<i64: 1, 128>}, {pipeline_mode = #tpu.pipeline_mode<synchronous>, transform_indices = @transform_3, window_bounds = array<i64: 128, 128>}, {pipeline_mode = #tpu.pipeline_mode<synchronous>, transform_indices = @transform_4, window_bounds = array<i64: 1, 128>}, {transform_indices = @transform_5, window_bounds = array<i64: 256, 128>}, {transform_indices = @transform_6, window_bounds = array<i64: 256, 128>}]} {
    %c0 = arith.constant 0 : index
    %c0_0 = arith.constant 0 : index
    %0 = vector.load %arg1[%c0, %c0_0] : memref<256x48xbf16, #tpu.memory_space<vmem>>, vector<256x48xbf16>
    %c0_1 = arith.constant 0 : index
    %c0_2 = arith.constant 0 : index
    %1 = vector.load %arg2[%c0_1, %c0_2] : memref<48x128xbf16, #tpu.memory_space<vmem>>, vector<48x128xbf16>
    %cst = arith.constant dense<0.000000e+00> : vector<256x128xf32>
    %2 = tpu.matmul %0, %1, %cst {dimension_numbers = #tpu.dot_dimension_numbers<[1], [0], [0], [1], [0, 0, 1, 1], [], []>} : vector<256x48xbf16>, vector<48x128xbf16>, vector<256x128xf32> -> vector<256x128xf32>
    %c0_3 = arith.constant 0 : index
    %c0_4 = arith.constant 0 : index
    %3 = vector.load %arg3[%c0_3, %c0_4] : memref<1x128xf32, #tpu.memory_space<vmem>>, vector<1x128xf32>
    %4 = vector.broadcast %3 : vector<1x128xf32> to vector<256x128xf32>
    %5 = arith.addf %2, %4 : vector<256x128xf32>
    %6 = arith.truncf %5 : vector<256x128xf32> to vector<256x128xbf16>
    %c0_5 = arith.constant 0 : index
    %c0_6 = arith.constant 0 : index
    %7 = vector.load %arg6[%c0_5, %c0_6] : memref<256x128xbf16, #tpu.memory_space<vmem>>, vector<256x128xbf16>
    tpu.vector_store %arg6[%c0_5, %c0_6], %6 {strides = array<i32>} : memref<256x128xbf16, #tpu.memory_space<vmem>>, vector<256x128xbf16>,
    %c0_7 = arith.constant 0 : index
    %c0_8 = arith.constant 0 : index
    %8 = vector.load %arg4[%c0_7, %c0_8] : memref<128x128xbf16, #tpu.memory_space<vmem>>, vector<128x128xbf16>
    %cst_9 = arith.constant dense<0.000000e+00> : vector<256x128xf32>
    %9 = tpu.matmul %6, %8, %cst_9 {dimension_numbers = #tpu.dot_dimension_numbers<[1], [0], [0], [1], [0, 0, 1, 1], [], []>} : vector<256x128xbf16>, vector<128x128xbf16>, vector<256x128xf32> -> vector<256x128xf32>
    %c0_10 = arith.constant 0 : index
    %c0_11 = arith.constant 0 : index
    %10 = vector.load %arg5[%c0_10, %c0_11] : memref<1x128xf32, #tpu.memory_space<vmem>>, vector<1x128xf32>
    %11 = vector.broadcast %10 : vector<1x128xf32> to vector<256x128xf32>
    %12 = arith.addf %9, %11 : vector<256x128xf32>
    %c0_12 = arith.constant 0 : index
    %c0_13 = arith.constant 0 : index
    %13 = vector.load %arg7[%c0_12, %c0_13] : memref<256x128xf32, #tpu.memory_space<vmem>>, vector<256x128xf32>
    tpu.vector_store %arg7[%c0_12, %c0_13], %12 {strides = array<i32>} : memref<256x128xf32, #tpu.memory_space<vmem>>, vector<256x128xf32>,
    return
  }
  func.func @transform_0(%arg0: i32) -> (i32, i32) {
    %c0_i32 = arith.constant 0 : i32
    %c0_i32_0 = arith.constant 0 : i32
    return %arg0, %c0_i32 : i32, i32
  }
  func.func @transform_1(%arg0: i32) -> (i32, i32) {
    %c0_i32 = arith.constant 0 : i32
    %c0_i32_0 = arith.constant 0 : i32
    %c0_i32_1 = arith.constant 0 : i32
    return %c0_i32, %c0_i32_0 : i32, i32
  }
  func.func @transform_2(%arg0: i32) -> (i32, i32) {
    %c0_i32 = arith.constant 0 : i32
    %c0_i32_0 = arith.constant 0 : i32
    %c0_i32_1 = arith.constant 0 : i32
    return %c0_i32, %c0_i32_0 : i32, i32
  }
  func.func @transform_3(%arg0: i32) -> (i32, i32) {
    %c0_i32 = arith.constant 0 : i32
    %c0_i32_0 = arith.constant 0 : i32
    %c0_i32_1 = arith.constant 0 : i32
    return %c0_i32, %c0_i32_0 : i32, i32
  }
  func.func @transform_4(%arg0: i32) -> (i32, i32) {
    %c0_i32 = arith.constant 0 : i32
    %c0_i32_0 = arith.constant 0 : i32
    %c0_i32_1 = arith.constant 0 : i32
    return %c0_i32, %c0_i32_0 : i32, i32
  }
  func.func @transform_5(%arg0: i32) -> (i32, i32) {
    %c0_i32 = arith.constant 0 : i32
    %c0_i32_0 = arith.constant 0 : i32
    return %arg0, %c0_i32 : i32, i32
  }
  func.func @transform_6(%arg0: i32) -> (i32, i32) {
    %c0_i32 = arith.constant 0 : i32
    %c0_i32_0 = arith.constant 0 : i32
    return %arg0, %c0_i32 : i32, i32
  }
}

module attributes {stable_mosaic.version = 11 : i64} {
  func.func @_bag_kernel(%arg0: i32, %arg1: memref<1x16x128xbf16, #tpu.memory_space<vmem>>, %arg2: memref<128x2xf32, #tpu.memory_space<vmem>>, %arg3: memref<1x2xf32, #tpu.memory_space<vmem>>, %arg4: memref<1x1x2xf32, #tpu.memory_space<vmem>>) attributes {dimension_semantics = [#tpu.dimension_semantics<parallel>], iteration_bounds = array<i64: 2>, scalar_prefetch = 0 : i64, scratch_operands = 0 : i64, tpu.core_type = #tpu.core_type<tc>, window_params = [{transform_indices = @transform_0, window_bounds = array<i64: 1, 16, 128>}, {pipeline_mode = #tpu.pipeline_mode<synchronous>, transform_indices = @transform_1, window_bounds = array<i64: 128, 2>}, {pipeline_mode = #tpu.pipeline_mode<synchronous>, transform_indices = @transform_2, window_bounds = array<i64: 1, 2>}, {transform_indices = @transform_3, window_bounds = array<i64: 1, 1, 2>}]} {
    %c0 = arith.constant 0 : index
    %c0_0 = arith.constant 0 : index
    %c0_1 = arith.constant 0 : index
    %0 = vector.load %arg1[%c0, %c0_0, %c0_1] : memref<1x16x128xbf16, #tpu.memory_space<vmem>>, vector<1x16x128xbf16>
    %1 = vector.shape_cast %0 : vector<1x16x128xbf16> to vector<16x128xbf16>
    %2 = vector.extract_strided_slice %1 {offsets = [0, 0], sizes = [4, 128], strides = [1, 1]} : vector<16x128xbf16> to vector<4x128xbf16>
    %3 = arith.extf %2 : vector<4x128xbf16> to vector<4x128xf32>
    %cst = arith.constant dense<0.000000e+00> : vector<4x16xf32>
    %4 = tpu.matmul %2, %1, %cst {dimension_numbers = #tpu.dot_dimension_numbers<[1], [1], [0], [0], [0, 0, 1, 0], [], []>} : vector<4x128xbf16>, vector<16x128xbf16>, vector<4x16xf32> -> vector<4x16xf32>
    %5 = arith.mulf %3, %3 : vector<4x128xf32>
    %cst_2 = arith.constant dense<0.000000e+00> : vector<4xf32>
    %6 = vector.multi_reduction <add>, %5, %cst_2 [1] : vector<4x128xf32> to vector<4xf32>
    %7 = vector.shape_cast %6 : vector<4xf32> to vector<4x1xf32>
    %cst_3 = arith.constant 2.000000e+00 : f32
    %8 = vector.broadcast %cst_3 : f32 to vector<4x16xf32>
    %9 = arith.mulf %8, %4 : vector<4x16xf32>
    %10 = vector.broadcast %7 : vector<4x1xf32> to vector<4x16xf32>
    %11 = arith.subf %10, %9 : vector<4x16xf32>
    %cst_4 = arith.constant dense<0x7F800000> : vector<16xf32>
    %12 = vector.multi_reduction <minimumf>, %11, %cst_4 [0] : vector<4x16xf32> to vector<16xf32>
    %13 = vector.shape_cast %12 : vector<16xf32> to vector<1x16xf32>
    %14 = tpu.iota {dimensions = array<i32: 0>} : vector<4x16xi32>
    %15 = vector.broadcast %13 : vector<1x16xf32> to vector<4x16xf32>
    %16 = arith.cmpf ole, %11, %15 : vector<4x16xf32>
    %c4_i32 = arith.constant 4 : i32
    %17 = vector.broadcast %c4_i32 : i32 to vector<4x16xi32>
    %18 = arith.select %16, %14, %17 : vector<4x16xi1>, vector<4x16xi32>
    %cst_5 = arith.constant dense<2147483647> : vector<16xi32>
    %19 = vector.multi_reduction <minsi>, %18, %cst_5 [0] : vector<4x16xi32> to vector<16xi32>
    %20 = vector.shape_cast %19 : vector<16xi32> to vector<1x16xi32>
    %21 = vector.broadcast %20 : vector<1x16xi32> to vector<4x16xi32>
    %22 = arith.cmpi eq, %14, %21 : vector<4x16xi32>
    %23 = arith.extui %22 : vector<4x16xi1> to vector<4x16xi32>
    %24 = arith.sitofp %23 : vector<4x16xi32> to vector<4x16xf32>
    %25 = arith.truncf %24 : vector<4x16xf32> to vector<4x16xbf16>
    %cst_6 = arith.constant dense<0.000000e+00> : vector<4x128xf32>
    %26 = tpu.matmul %25, %1, %cst_6 {dimension_numbers = #tpu.dot_dimension_numbers<[1], [0], [0], [1], [0, 0, 1, 1], [], []>} : vector<4x16xbf16>, vector<16x128xbf16>, vector<4x128xf32> -> vector<4x128xf32>
    %cst_7 = arith.constant dense<0.000000e+00> : vector<4xf32>
    %27 = vector.multi_reduction <add>, %24, %cst_7 [1] : vector<4x16xf32> to vector<4xf32>
    %28 = vector.shape_cast %27 : vector<4xf32> to vector<4x1xf32>
    %cst_8 = arith.constant 1.000000e+00 : f32
    %29 = vector.broadcast %cst_8 : f32 to vector<4x1xf32>
    %30 = arith.maximumf %28, %29 : vector<4x1xf32>
    %31 = vector.broadcast %30 : vector<4x1xf32> to vector<4x128xf32>
    %32 = arith.divf %26, %31 : vector<4x128xf32>
    %c0_9 = arith.constant 0 : index
    %c0_10 = arith.constant 0 : index
    %33 = vector.load %arg2[%c0_9, %c0_10] : memref<128x2xf32, #tpu.memory_space<vmem>>, vector<128x2xf32>
    %cst_11 = arith.constant dense<0.000000e+00> : vector<4x2xf32>
    %34 = tpu.matmul %32, %33, %cst_11 {dimension_numbers = #tpu.dot_dimension_numbers<[1], [0], [0], [1], [0, 0, 1, 1], [], []>} : vector<4x128xf32>, vector<128x2xf32>, vector<4x2xf32> -> vector<4x2xf32>
    %c0_12 = arith.constant 0 : index
    %c0_13 = arith.constant 0 : index
    %35 = vector.load %arg3[%c0_12, %c0_13] : memref<1x2xf32, #tpu.memory_space<vmem>>, vector<1x2xf32>
    %36 = vector.broadcast %35 : vector<1x2xf32> to vector<4x2xf32>
    %37 = arith.addf %34, %36 : vector<4x2xf32>
    %cst_14 = arith.constant dense<0xFF800000> : vector<4xf32>
    %38 = vector.multi_reduction <maximumf>, %37, %cst_14 [1] : vector<4x2xf32> to vector<4xf32>
    %39 = vector.shape_cast %38 : vector<4xf32> to vector<4x1xf32>
    %40 = vector.broadcast %39 : vector<4x1xf32> to vector<4x2xf32>
    %41 = arith.subf %37, %40 : vector<4x2xf32>
    %42 = math.exp %41 : vector<4x2xf32>
    %cst_15 = arith.constant dense<0.000000e+00> : vector<4xf32>
    %43 = vector.multi_reduction <add>, %42, %cst_15 [1] : vector<4x2xf32> to vector<4xf32>
    %44 = vector.shape_cast %43 : vector<4xf32> to vector<4x1xf32>
    %45 = tpu.reciprocal %44 {approx = true} : vector<4x1xf32> -> vector<4x1xf32>
    %46 = vector.broadcast %45 : vector<4x1xf32> to vector<4x2xf32>
    %47 = arith.mulf %42, %46 : vector<4x2xf32>
    %cst_16 = arith.constant dense<0xFF800000> : vector<4xf32>
    %48 = vector.multi_reduction <maximumf>, %47, %cst_16 [1] : vector<4x2xf32> to vector<4xf32>
    %49 = vector.shape_cast %48 : vector<4xf32> to vector<4x1xf32>
    %cst_17 = arith.constant dense<0xFF800000> : vector<1xf32>
    %50 = vector.multi_reduction <maximumf>, %49, %cst_17 [0] : vector<4x1xf32> to vector<1xf32>
    %51 = vector.shape_cast %50 : vector<1xf32> to vector<1x1xf32>
    %52 = tpu.iota {dimensions = array<i32: 0>} : vector<4x1xi32>
    %53 = vector.broadcast %51 : vector<1x1xf32> to vector<4x1xf32>
    %54 = arith.cmpf oge, %49, %53 : vector<4x1xf32>
    %c4_i32_18 = arith.constant 4 : i32
    %55 = vector.broadcast %c4_i32_18 : i32 to vector<4x1xi32>
    %56 = arith.select %54, %52, %55 : vector<4x1xi1>, vector<4x1xi32>
    %cst_19 = arith.constant dense<2147483647> : vector<1xi32>
    %57 = vector.multi_reduction <minsi>, %56, %cst_19 [0] : vector<4x1xi32> to vector<1xi32>
    %58 = vector.shape_cast %57 : vector<1xi32> to vector<1x1xi32>
    %59 = vector.broadcast %58 : vector<1x1xi32> to vector<4x1xi32>
    %60 = arith.cmpi eq, %52, %59 : vector<4x1xi32>
    %61 = arith.extui %60 : vector<4x1xi1> to vector<4x1xi32>
    %62 = arith.sitofp %61 : vector<4x1xi32> to vector<4x1xf32>
    %63 = vector.broadcast %62 : vector<4x1xf32> to vector<4x2xf32>
    %64 = arith.mulf %63, %37 : vector<4x2xf32>
    %cst_20 = arith.constant dense<0.000000e+00> : vector<2xf32>
    %65 = vector.multi_reduction <add>, %64, %cst_20 [0] : vector<4x2xf32> to vector<2xf32>
    %66 = vector.shape_cast %65 : vector<2xf32> to vector<1x2xf32>
    %c0_21 = arith.constant 0 : index
    %c0_22 = arith.constant 0 : index
    %c0_23 = arith.constant 0 : index
    %67 = vector.load %arg4[%c0_21, %c0_22, %c0_23] : memref<1x1x2xf32, #tpu.memory_space<vmem>>, vector<1x1x2xf32>
    %68 = vector.shape_cast %67 : vector<1x1x2xf32> to vector<1x2xf32>
    %69 = vector.shape_cast %66 : vector<1x2xf32> to vector<1x1x2xf32>
    tpu.vector_store %arg4[%c0_21, %c0_22, %c0_23], %69 {strides = array<i32>} : memref<1x1x2xf32, #tpu.memory_space<vmem>>, vector<1x1x2xf32>,
    return
  }
  func.func @transform_0(%arg0: i32) -> (i32, i32, i32) {
    %c0_i32 = arith.constant 0 : i32
    %c0_i32_0 = arith.constant 0 : i32
    %c0_i32_1 = arith.constant 0 : i32
    return %arg0, %c0_i32, %c0_i32_0 : i32, i32, i32
  }
  func.func @transform_1(%arg0: i32) -> (i32, i32) {
    %c0_i32 = arith.constant 0 : i32
    %c0_i32_0 = arith.constant 0 : i32
    %c0_i32_1 = arith.constant 0 : i32
    return %c0_i32, %c0_i32_0 : i32, i32
  }
  func.func @transform_2(%arg0: i32) -> (i32, i32) {
    %c0_i32 = arith.constant 0 : i32
    %c0_i32_0 = arith.constant 0 : i32
    %c0_i32_1 = arith.constant 0 : i32
    return %c0_i32, %c0_i32_0 : i32, i32
  }
  func.func @transform_3(%arg0: i32) -> (i32, i32, i32) {
    %c0_i32 = arith.constant 0 : i32
    %c0_i32_0 = arith.constant 0 : i32
    %c0_i32_1 = arith.constant 0 : i32
    return %arg0, %c0_i32, %c0_i32_0 : i32, i32, i32
  }
}

</mosaic_0001>

<llo_original>
// kernel: _forward_arrays.3
$region0: #{_forward_arrays.3}
  #allocation0 [shape = 'u32[]', space=smem, size = 0x4, offset = 0x4, fixed_abs, tag = 'smem constant byte address 0x4 - core index']
  #allocation1 [shape = 'u32[144,128]{1,0:T(1,128)}', space=vmem, size = 0x12000, scoped, tag = 'internal scratch']
  %s0 = inlined_call_operand.vmem [shape: bf16[2,16,128], index: 0, kind: input, shape index: {}]
  %s1 = inlined_call_operand.vmem [shape: f32[128,2], index: 1, kind: input, shape index: {}]
  %s2 = inlined_call_operand.vmem [shape: f32[1,2], index: 2, kind: input, shape index: {}]
  %s3 = inlined_call_operand.hbm [shape: f32[2,1,2], index: 3, kind: output, shape index: {}]
  %s4 = sld [smem:[#allocation0]]
  $region45: #{_forward_arrays.3} parent=0
    _
  %s6 = ssub.s32 1, %s4
  %s7 = scalar_select 0, %s6, %s4
  $region1: #{_forward_arrays.3} parent=0
    #allocation2 [shape = 'u8[1024]{0}', space=vmem, size = 0x400, scoped, tag = 'output window, operand 0']
    #allocation3 [shape = 's32[2]{0}', space=sflag, size = 0x8, scoped, tag = 'scoped memory for _forward_arrays.3']
    %8 = vsyncpa [#allocation3], 0
    %s9 = scalar_lea.sflag [#allocation3], 1
    %10 = vsyncpa %s9, 0
    loop: start=0, step=1, limit=4
    $region2: #{_forward_arrays.3} parent=1 // loop_pre_header
      _
    $region3: #{_forward_arrays.3} parent=1 // loop_header
      %s12 = sphi 0, %s16
      %p13 = scmp.ge.s32.totalorder %s12, 4
      %s22 = sphi 0, %s24
      %s25 = sphi 0, %s22
      %s26 = sphi 0, %s25
      %s42 = sphi 0, %s26
      %s46 = sphi 0, %s46
      %s48 = sphi 0, %s46
      %s49 = sphi 0, %s48
      %s63 = sphi 0, %s49
      %s67 = sphi 0, %s67
      %s69 = sphi 0, %s67
      %s70 = sphi 0, %s69
      %s84 = sphi 0, %s70
      %s90 = sphi 0, %s92
      %s93 = sphi 0, %s90
      %s94 = sphi 0, %s93
      %s110 = sphi 0, %s94
    $region4: #{_forward_arrays.3} parent=1 // loop_header_branch
      %15 = sbr.rel (%p13) target = $region8
    $region5: #{_forward_arrays.3} parent=1 // loop_body
      %s17 = ssub.s32 %s12, 1
      %s18 = ssub.s32 %s12, 2
      %s19 = sadd.s32 %s12, 1
      %s20 = ssub.s32 %s12, %s19
      %p21 = scmp.eq.s32.totalorder %s20, 0
      %s23 = sadd.s32 %s22, 1
      %s24 = scalar_select %p21, %s22, %s23
      %p27 = pneg %p21
      %p28 = scmp.eq.s32.totalorder %s12, 1
      %p29 = por %p27, %p28
      %p30 = scmp.ne.s32.totalorder %s22, %s25
      %p31 = scmp.eq.s32.totalorder %s12, 0
      %p32 = por %p30, %p31
      %p33 = scmp.ne.s32.totalorder %s22, %s25
      %p34 = scmp.eq.s32.totalorder %s17, 1
      %p35 = por %p33, %p34
      %p36 = scmp.ne.s32.totalorder %s25, %s26
      %p37 = scmp.eq.s32.totalorder %s17, 0
      %p38 = por %p36, %p37
      %p39 = scmp.ne.s32.totalorder %s25, %s26
      %p40 = scmp.eq.s32.totalorder %s18, 1
      %p41 = por %p39, %p40
      %p43 = scmp.ne.s32.totalorder %s26, %s42
      %p44 = scmp.eq.s32.totalorder %s18, 0
      %p45 = por %p43, %p44
      %s47 = sadd.s32 %s46, 1
      %p50 = scmp.eq.s32.totalorder %s12, 1
      %p51 = scmp.ne.s32.totalorder %s46, %s48
      %p52 = scmp.eq.s32.totalorder %s12, 0
      %p53 = por %p51, %p52
      %p54 = scmp.ne.s32.totalorder %s46, %s48
      %p55 = scmp.eq.s32.totalorder %s17, 1
      %p56 = por %p54, %p55
      %p57 = scmp.ne.s32.totalorder %s48, %s49
      %p58 = scmp.eq.s32.totalorder %s17, 0
      %p59 = por %p57, %p58
      %p60 = scmp.ne.s32.totalorder %s48, %s49
      %p61 = scmp.eq.s32.totalorder %s18, 1
      %p62 = por %p60, %p61
      %p64 = scmp.ne.s32.totalorder %s49, %s63
      %p65 = scmp.eq.s32.totalorder %s18, 0
      %p66 = por %p64, %p65
      %s68 = sadd.s32 %s67, 1
      %p71 = scmp.eq.s32.totalorder %s12, 1
      %p72 = scmp.ne.s32.totalorder %s67, %s69
      %p73 = scmp.eq.s32.totalorder %s12, 0
      %p74 = por %p72, %p73
      %p75 = scmp.ne.s32.totalorder %s67, %s69
      %p76 = scmp.eq.s32.totalorder %s17, 1
      %p77 = por %p75, %p76
      %p78 = scmp.ne.s32.totalorder %s69, %s70
      %p79 = scmp.eq.s32.totalorder %s17, 0
      %p80 = por %p78, %p79
      %p81 = scmp.ne.s32.totalorder %s69, %s70
      %p82 = scmp.eq.s32.totalorder %s18, 1
      %p83 = por %p81, %p82
      %p85 = scmp.ne.s32.totalorder %s70, %s84
      %p86 = scmp.eq.s32.totalorder %s18, 0
      %p87 = por %p85, %p86
      %s88 = ssub.s32 %s12, %s19
      %p89 = scmp.eq.s32.totalorder %s88, 0
      %s91 = sadd.s32 %s90, 1
      %s92 = scalar_select %p89, %s90, %s91
      %p95 = pneg %p89
      %p96 = scmp.eq.s32.totalorder %s12, 1
      %p97 = por %p95, %p96
      %p98 = scmp.ne.s32.totalorder %s90, %s93
      %p99 = scmp.eq.s32.totalorder %s12, 0
      %p100 = por %p98, %p99
      %p101 = scmp.ne.s32.totalorder %s90, %s93
      %p102 = scmp.eq.s32.totalorder %s17, 1
      %p103 = por %p101, %p102
      %p104 = scmp.ne.s32.totalorder %s93, %s94
      %p105 = scmp.eq.s32.totalorder %s17, 0
      %p106 = por %p104, %p105
      %p107 = scmp.ne.s32.totalorder %s93, %s94
      %p108 = scmp.eq.s32.totalorder %s18, 1
      %p109 = por %p107, %p108
      %p111 = scmp.ne.s32.totalorder %s94, %s110
      %p112 = scmp.eq.s32.totalorder %s18, 0
      %p113 = por %p111, %p112
      %p114 = scmp.le.s32.totalorder 1, %s12
      %p115 = scmp.lt.s32.totalorder %s12, 3
      %p116 = pnand %p114, %p115
      %p117 = pneg %p116
      // Predicated region
      $region9: #{_forward_arrays.3} parent=5 // pred_check
        _
      $region10: #{_forward_arrays.3} parent=5 // pred_check_branch
        %119 = sbr.rel (%p116) target = $region12
      $region11: #{_forward_arrays.3} parent=5 // pred_region
        %s120 = ssub.s32 %s12, 1
        // Predicated region
        $region13: #{_forward_arrays.3} parent=11 // pred_check
          %p121 = pneg %p59
        $region14: #{_forward_arrays.3} parent=11 // pred_check_branch
          %123 = sbr.rel (%p121) target = $region16
        $region15: #{_forward_arrays.3} parent=11 // pred_region
          _
        $region16: #{_forward_arrays.3} parent=11 // pred_fallthru
          _
        // Predicated region
        $region17: #{_forward_arrays.3} parent=11 // pred_check
          %p124 = pneg %p80
        $region18: #{_forward_arrays.3} parent=11 // pred_check_branch
          %126 = sbr.rel (%p124) target = $region20
        $region19: #{_forward_arrays.3} parent=11 // pred_region
          _
        $region20: #{_forward_arrays.3} parent=11 // pred_fallthru
          _
      $region12: #{_forward_arrays.3} parent=5 // pred_fallthru
        _
      %p127 = scmp.lt.s32.totalorder %s12, 2
      // Predicated region
      $region21: #{_forward_arrays.3} parent=5 // pred_check
        %p128 = pneg %p127
      $region22: #{_forward_arrays.3} parent=5 // pred_check_branch
        %130 = sbr.rel (%p128) target = $region24
      $region23: #{_forward_arrays.3} parent=5 // pred_region
        // Predicated region
        $region25: #{_forward_arrays.3} parent=23 // pred_check
          %p131 = pneg %p32
        $region26: #{_forward_arrays.3} parent=23 // pred_check_branch
          %133 = sbr.rel (%p131) target = $region28
        $region27: #{_forward_arrays.3} parent=23 // pred_region
          %p134 = scmp.lt.s32.totalorder %s12, 1
          %s135 = scalar_select %p134, %s12, 1
          %s136 = smul.addr %s135, 2
          %s137 = smul.addr %s136, 4
          %s138 = scalar_lea.vmem %s0, %s137
        $region28: #{_forward_arrays.3} parent=23 // pred_fallthru
          _
      $region24: #{_forward_arrays.3} parent=5 // pred_fallthru
        _
      %p139 = scmp.le.s32.totalorder 1, %s12
      %p140 = scmp.lt.s32.totalorder %s12, 3
      %p141 = pnand %p139, %p140
      %p142 = pneg %p141
      // Predicated region
      $region29: #{_forward_arrays.3} parent=5 // pred_check
        _
      $region30: #{_forward_arrays.3} parent=5 // pred_check_branch
        %144 = sbr.rel (%p141) target = $region32
      $region31: #{_forward_arrays.3} parent=5 // pred_region
        %s145 = ssub.s32 %s12, 1
        %p146 = scmp.lt.s32.totalorder %s17, 1
        %s147 = scalar_select %p146, %s17, 1
        %s148 = smul.addr %s147, 2
        %s149 = smul.addr %s148, 4
        %s150 = scalar_lea.vmem %s0, %s149
        %p151 = pneg %p38
        %p152 = pneg %p35
        %p153 = pneg %p59
        %p154 = pneg %p56
        %p155 = pneg %p80
        %p156 = pneg %p77
        %p157 = pneg %p106
        %p158 = pneg %p103
        %s159 = sand.u32 %s93, 1
        %s160 = scalar_lea.sflag [#allocation3], %s159
        %s161 = sand.u32 %s93, 1
        %s162 = scalar_lea.vmem [#allocation2], %s161
        %p163 = scmp.lt.s32.totalorder %s17, 1
        %s164 = scalar_select %p163, %s17, 1
        %s165 = smul.addr %s164, 2
        %s166 = smul.addr %s165, 4
        %s167 = scalar_lea.vmem %s0, %s166
        %v169 = vld [vmem:[%s167] sm:$0xf]
        %v170 = vld [vmem:[%s167 + $0x4] sm:$0xf]
        %v171 = vunpack.c.l.bf16 %v169
        %v174 = vunpack.c.l.b16 %v169
        %v175 = vunpack.c.l.b16 %v170
        %v176 = vpack.c.b16 %v175, %v174
        %178 = vmatprep.subr.bf16.mxu0 0
        %179 = vmatpush1.bf16.xpose.msra.mxu0 0
        %180 = vmatprep.subr.bf16.mxu0 0
        %181 = vmatpush1.bf16.xpose.msra.mxu0 0
        %182 = vmatprep.subr.bf16.mxu0 0
        %183 = vmatpush1.bf16.xpose.msra.mxu0 0
        %184 = vmatprep.subr.bf16.mxu0 0
        %185 = vmatpush1.bf16.xpose.msra.mxu0 0
        %186 = vmatprep.subr.bf16.mxu0 0
        %187 = vmatpush1.bf16.xpose.msra.mxu0 0
        %188 = vmatprep.subr.bf16.mxu0 0
        %189 = vmatpush1.bf16.xpose.msra.mxu0 0
        %190 = vmatprep.subr.bf16.mxu0 0
        %191 = vmatpush1.bf16.xpose.msra.mxu0 0
        %192 = vmatprep.subr.bf16.mxu0 0
        %193 = vmatpush1.bf16.xpose.msra.mxu0 %v176
        %194 = vmatprep.subr.bf16.mxu0 0
        %195 = vmatpush2.bf16.xpose.msra.mxu0 0
        %196 = vmatprep.subr.bf16.mxu0 0
        %197 = vmatpush2.bf16.xpose.msra.mxu0 0
        %198 = vmatprep.subr.bf16.mxu0 0
        %199 = vmatpush2.bf16.xpose.msra.mxu0 0
        %200 = vmatprep.subr.bf16.mxu0 0
        %201 = vmatpush2.bf16.xpose.msra.mxu0 0
        %202 = vmatprep.subr.bf16.mxu0 0
        %203 = vmatpush2.bf16.xpose.msra.mxu0 0
        %204 = vmatprep.subr.bf16.mxu0 0
        %205 = vmatpush2.bf16.xpose.msra.mxu0 0
        %206 = vmatprep.subr.bf16.mxu0 0
        %207 = vmatpush2.bf16.xpose.msra.mxu0 0
        %208 = vmatprep.subr.bf16.mxu0 0
        %209 = vmatpush2.bf16.xpose.msra.mxu0 0
        %210 = vmatprep.mubr.bf16.mxu0 0
        %211 = vmatmul.mubr.bf16.gmra.mxu0 %v169
        %v212 = vpop.f32.mrf.mxu0
        %v213 = vadd.f32 0.0, %v212
        %v214 = vpop.f32.mrf.mxu0
        %v215 = vpop.f32.mrf.mxu0
        %v216 = vpop.f32.mrf.mxu0
        %217 = vdwg.mxu0
        %v218 = vmul.f32 %v171, %v171
        %vm219 = vcmask 1043456
        %v220 = vsel %vm219, %v218, 0.0
        %221 = vadd.xlane.f32.xlu0 %v220
        %v222 = vpop.xlane.xlu0 %221
        %v223 = vmul.f32 %v213, 2.0
        %v224 = vsub.f32 %v222, %v223
        %vm225 = vcmask 125952
        %v226 = vsel %vm225, %v224, inf
        %v227 = vrot.slane %v226, 4
        %v228 = vmin.f32 %v226, %v227
        %v229 = vrot.slane %v228, 2
        %v230 = vmin.f32 %v228, %v229
        %v231 = vrot.slane %v230, 1
        %v232 = vmin.f32 %v230, %v231
        %v233 = vlaneseq
        %v234 = vshrl.u32 %v233, 7
        %vm235 = vcmp.le.f32.partialorder %v224, %v232
        %v236 = vsel %vm235, %v234, 4
        %v237 = vsel %vm225, %v236, 2147483647
        %v238 = vrot.slane %v237, 4
        %vm239 = vcmp.lt.s32.totalorder %v237, %v238
        %v240 = vsel %vm239, %v237, %v238
        %v241 = vrot.slane %v240, 2
        %vm242 = vcmp.lt.s32.totalorder %v240, %v241
        %v243 = vsel %vm242, %v240, %v241
        %v244 = vrot.slane %v243, 1
        %vm245 = vcmp.lt.s32.totalorder %v243, %v244
        %v246 = vsel %vm245, %v243, %v244
        %vm247 = vcmp.eq.s32.totalorder %v234, %v246
        %v248 = vsel %vm247, 1, 0
        %v249 = vcvt.s32.f32 %v248
        %v250 = vpack.c.bf16 %v249, %v249
        %vm251 = vcmask 130048
        %v253 = vsel %vm251, %v250, 0
        %255 = vmatprep.subr.bf16.mxu0 0
        %256 = vmatpush1.bf16.msra.mxu0 0
        %257 = vmatprep.subr.bf16.mxu0 0
        %258 = vmatpush1.bf16.msra.mxu0 0
        %259 = vmatprep.subr.bf16.mxu0 0
        %260 = vmatpush1.bf16.msra.mxu0 0
        %261 = vmatprep.subr.bf16.mxu0 0
        %262 = vmatpush1.bf16.msra.mxu0 0
        %263 = vmatprep.subr.bf16.mxu0 0
        %264 = vmatpush1.bf16.msra.mxu0 0
        %265 = vmatprep.subr.bf16.mxu0 0
        %266 = vmatpush1.bf16.msra.mxu0 0
        %267 = vmatprep.subr.bf16.mxu0 0
        %268 = vmatpush1.bf16.msra.mxu0 0
        %269 = vmatprep.subr.bf16.mxu0 0
        %270 = vmatpush1.bf16.msra.mxu0 %v176
        %271 = vmatprep.subr.bf16.mxu0 0
        %272 = vmatpush2.bf16.msra.mxu0 0
        %273 = vmatprep.subr.bf16.mxu0 0
        %274 = vmatpush2.bf16.msra.mxu0 0
        %275 = vmatprep.subr.bf16.mxu0 0
        %276 = vmatpush2.bf16.msra.mxu0 0
        %277 = vmatprep.subr.bf16.mxu0 0
        %278 = vmatpush2.bf16.msra.mxu0 0
        %279 = vmatprep.subr.bf16.mxu0 0
        %280 = vmatpush2.bf16.msra.mxu0 0
        %281 = vmatprep.subr.bf16.mxu0 0
        %282 = vmatpush2.bf16.msra.mxu0 0
        %283 = vmatprep.subr.bf16.mxu0 0
        %284 = vmatpush2.bf16.msra.mxu0 0
        %285 = vmatprep.subr.bf16.mxu0 0
        %286 = vmatpush2.bf16.msra.mxu0 0
        %287 = vmatprep.mubr.bf16.mxu0 0
        %288 = vmatmul.mubr.bf16.gmra.mxu0 %v253
        %v289 = vpop.f32.mrf.mxu0
        %v290 = vadd.f32 0.0, %v289
        %v291 = vpop.f32.mrf.mxu0
        %v292 = vpop.f32.mrf.mxu0
        %v293 = vpop.f32.mrf.mxu0
        %294 = vdwg.mxu0
        %v295 = vsel %vm225, %v249, 0.0
        %296 = vadd.xlane.f32.xlu0 %v295
        %v297 = vpop.xlane.xlu0 %296
        %v298 = vmax.f32 %v297, 1.0
        %v299 = vrcp.pop %v298
        %v300 = vmul.f32 %v290, %v299
        %v301 = vld [vmem:[%s1] sm:$0xff]
        %v302 = vld [vmem:[%s1 + $0x8] sm:$0xff]
        %v303 = vld [vmem:[%s1 + $0x10] sm:$0xff]
        %v304 = vld [vmem:[%s1 + $0x18] sm:$0xff]
        %v305 = vld [vmem:[%s1 + $0x20] sm:$0xff]
        %v306 = vld [vmem:[%s1 + $0x28] sm:$0xff]
        %v307 = vld [vmem:[%s1 + $0x30] sm:$0xff]
        %v308 = vld [vmem:[%s1 + $0x38] sm:$0xff]
        %v309 = vld [vmem:[%s1 + $0x40] sm:$0xff]
        %v310 = vld [vmem:[%s1 + $0x48] sm:$0xff]
        %v311 = vld [vmem:[%s1 + $0x50] sm:$0xff]
        %v312 = vld [vmem:[%s1 + $0x58] sm:$0xff]
        %v313 = vld [vmem:[%s1 + $0x60] sm:$0xff]
        %v314 = vld [vmem:[%s1 + $0x68] sm:$0xff]
        %v315 = vld [vmem:[%s1 + $0x70] sm:$0xff]
        %v316 = vld [vmem:[%s1 + $0x78] sm:$0xff]
        %v317 = vld [vmem:[%s2] sm:$0x1]
        %v319 = vlaneseq
        %v320 = vshrl.u32 %v319, 7
        %v321 = vsub.s32 0, %v320
        %v322 = vrot.slane %v317, %v321
        %324 = vmatprep.subr.mxu0 0.0
        %325 = vmatpush1.msra.mxu0 %v316
        %326 = vmatprep.subr.mxu0 0.0
        %327 = vmatpush1.msra.mxu0 %v315
        %328 = vmatprep.subr.mxu0 0.0
        %329 = vmatpush1.msra.mxu0 %v314
        %330 = vmatprep.subr.mxu0 0.0
        %331 = vmatpush1.msra.mxu0 %v313
        %332 = vmatprep.subr.mxu0 0.0
        %333 = vmatpush1.msra.mxu0 %v312
        %334 = vmatprep.subr.mxu0 0.0
        %335 = vmatpush1.msra.mxu0 %v311
        %336 = vmatprep.subr.mxu0 0.0
        %337 = vmatpush1.msra.mxu0 %v310
        %338 = vmatprep.subr.mxu0 0.0
        %339 = vmatpush1.msra.mxu0 %v309
        %340 = vmatprep.subr.mxu0 0.0
        %341 = vmatpush1.msra.mxu0 %v308
        %342 = vmatprep.subr.mxu0 0.0
        %343 = vmatpush1.msra.mxu0 %v307
        %344 = vmatprep.subr.mxu0 0.0
        %345 = vmatpush1.msra.mxu0 %v306
        %346 = vmatprep.subr.mxu0 0.0
        %347 = vmatpush1.msra.mxu0 %v305
        %348 = vmatprep.subr.mxu0 0.0
        %349 = vmatpush1.msra.mxu0 %v304
        %350 = vmatprep.subr.mxu0 0.0
        %351 = vmatpush1.msra.mxu0 %v303
        %352 = vmatprep.subr.mxu0 0.0
        %353 = vmatpush1.msra.mxu0 %v302
        %354 = vmatprep.subr.mxu0 0.0
        %355 = vmatpush1.msra.mxu0 %v301
        %356 = vmatprep.subr.mxu0 0.0
        %357 = vmatpush2.msra.mxu0 0.0
        %358 = vmatprep.subr.mxu0 0.0
        %359 = vmatpush2.msra.mxu0 0.0
        %360 = vmatprep.subr.mxu0 0.0
        %361 = vmatpush2.msra.mxu0 0.0
        %362 = vmatprep.subr.mxu0 0.0
        %363 = vmatpush2.msra.mxu0 0.0
        %364 = vmatprep.subr.mxu0 0.0
        %365 = vmatpush2.msra.mxu0 0.0
        %366 = vmatprep.subr.mxu0 0.0
        %367 = vmatpush2.msra.mxu0 0.0
        %368 = vmatprep.subr.mxu0 0.0
        %369 = vmatpush2.msra.mxu0 0.0
        %370 = vmatprep.subr.mxu0 0.0
        %371 = vmatpush2.msra.mxu0 0.0
        %372 = vmatprep.subr.mxu0 0.0
        %373 = vmatpush2.msra.mxu0 0.0
        %374 = vmatprep.subr.mxu0 0.0
        %375 = vmatpush2.msra.mxu0 0.0
        %376 = vmatprep.subr.mxu0 0.0
        %377 = vmatpush2.msra.mxu0 0.0
        %378 = vmatprep.subr.mxu0 0.0
        %379 = vmatpush2.msra.mxu0 0.0
        %380 = vmatprep.subr.mxu0 0.0
        %381 = vmatpush2.msra.mxu0 0.0
        %382 = vmatprep.subr.mxu0 0.0
        %383 = vmatpush2.msra.mxu0 0.0
        %384 = vmatprep.subr.mxu0 0.0
        %385 = vmatpush2.msra.mxu0 0.0
        %386 = vmatprep.subr.mxu0 0.0
        %387 = vmatpush2.msra.mxu0 0.0
        %388 = vmatprep.mubr.f32.mxu0 0.0
        %389 = vmatmul.mubr.f32.gmra.mxu0 %v300
        %v390 = vpop.f32.mrf.mxu0
        %v391 = vadd.f32 %v322, %v390
        %v392 = vpop.f32.mrf.mxu0
        %393 = vdwg.mxu0
        %vm394 = vcmask 11264
        %v395 = vsel %vm394, %v391, -inf
        %396 = vmax.xlane.f32.xlu0 %v395
        %v397 = vpop.xlane.xlu0 %396
        %v398 = vsub.f32 %v391, %v397
        %v399 = vmul.f32 %v398, 1.442695
        %v400 = vpow.pop %v399
        %v401 = vsel %vm394, %v400, 0.0
        %402 = vadd.xlane.f32.xlu0 %v401
        %v403 = vpop.xlane.xlu0 %402
        %v404 = vrcp.pop %v403
        %v405 = vmul.f32 %v400, %v404
        %v406 = vsel %vm394, %v405, -inf
        %407 = vmax.xlane.f32.xlu0 %v406
        %v408 = vpop.xlane.xlu0 %407
        %v409 = vsel %vm219, %v408, -inf
        %v410 = vrot.slane %v409, 4
        %v411 = vmax.f32 %v409, %v410
        %v412 = vrot.slane %v411, 2
        %v413 = vmax.f32 %v411, %v412
        %v414 = vrot.slane %v413, 1
        %v415 = vmax.f32 %v413, %v414
        %vm416 = vcmp.ge.f32.partialorder %v408, %v415
        %v417 = vsel %vm416, %v234, 4
        %v418 = vsel %vm219, %v417, 2147483647
        %v419 = vrot.slane %v418, 4
        %vm420 = vcmp.lt.s32.totalorder %v418, %v419
        %v421 = vsel %vm420, %v418, %v419
        %v422 = vrot.slane %v421, 2
        %vm423 = vcmp.lt.s32.totalorder %v421, %v422
        %v424 = vsel %vm423, %v421, %v422
        %v425 = vrot.slane %v424, 1
        %vm426 = vcmp.lt.s32.totalorder %v424, %v425
        %v427 = vsel %vm426, %v424, %v425
        %vm428 = vcmp.eq.s32.totalorder %v234, %v427
        %v429 = vsel %vm428, 1, 0
        %v430 = vcvt.s32.f32 %v429
        %v431 = vmul.f32 %v430, %v391
        %v432 = vsel %vm394, %v431, 0.0
        %v433 = vrot.slane %v432, 4
        %v434 = vadd.f32 %v432, %v433
        %v435 = vrot.slane %v434, 2
        %v436 = vadd.f32 %v434, %v435
        %v437 = vrot.slane %v436, 1
        %v438 = vadd.f32 %v436, %v437
        %vm439 = vcmask 8192
        %440 = vst.msk [vmem:[%s162] sm:$0x1] %vm439, %v438
        %s441 = sand.u32 %s93, 1
        %s442 = scalar_lea.sflag [#allocation3], %s441
        %s443 = sand.u32 %s93, 1
        %s444 = scalar_lea.vmem [#allocation2], %s443
        // Predicated region
        $region33: #{_forward_arrays.3} parent=31 // pred_check
          %p445 = pneg %p103
        $region34: #{_forward_arrays.3} parent=31 // pred_check_branch
          %447 = sbr.rel (%p445) target = $region36
        $region35: #{_forward_arrays.3} parent=31 // pred_region
          %s449 = ssub.s32 16, 16
          %450 = vsyncadd %s442, %s449
          %s451 = smul.addr %s17, 16
          %s452 = scalar_lea.hbm %s3, %s451
          %s454 = sshll.u32 %s444, 4
          %s455 = int_to_ptr.vmem [resolvable:$true] %s454
          %457 = dma.vmem_to_hbm [thread:$0]  %s455, 16, %s452, %s442
        $region36: #{_forward_arrays.3} parent=31 // pred_fallthru
          _
      $region32: #{_forward_arrays.3} parent=5 // pred_fallthru
        _
      %p458 = scmp.le.s32.totalorder 2, %s12
      // Predicated region
      $region37: #{_forward_arrays.3} parent=5 // pred_check
        %p459 = pneg %p458
      $region38: #{_forward_arrays.3} parent=5 // pred_check_branch
        %461 = sbr.rel (%p459) target = $region40
      $region39: #{_forward_arrays.3} parent=5 // pred_region
        %s462 = ssub.s32 %s12, 2
        // Predicated region
        $region41: #{_forward_arrays.3} parent=39 // pred_check
          %p463 = pneg %p109
        $region42: #{_forward_arrays.3} parent=39 // pred_check_branch
          %465 = sbr.rel (%p463) target = $region44
        $region43: #{_forward_arrays.3} parent=39 // pred_region
          %s466 = sand.u32 %s94, 1
          %s467 = scalar_lea.sflag [#allocation3], %s466
          %s468 = sand.u32 %s94, 1
          %s469 = scalar_lea.vmem [#allocation2], %s468
          %470 = dma.done %s467, 16
        $region44: #{_forward_arrays.3} parent=39 // pred_fallthru
          _
      $region40: #{_forward_arrays.3} parent=5 // pred_fallthru
        _
    $region6: #{_forward_arrays.3} parent=1 // loop_footer
      %s16 = sadd.s32 1, %s12
    $region7: #{_forward_arrays.3} parent=1 // loop_footer_branch
      %11 = sbr.rel target = $region3
    $region8: #{_forward_arrays.3} parent=1 // loop_exit
      _
    %471 = vsyncpa [#allocation3], 1
    %s472 = scalar_lea.sflag [#allocation3], 1
    %473 = vsyncpa %s472, 1

// kernel: _forward_arrays.2
$region0: #{_forward_arrays.2}
  #allocation0 [shape = 'u32[]', space=smem, size = 0x4, offset = 0x4, fixed_abs, tag = 'smem constant byte address 0x4 - core index']
  #allocation1 [shape = 'u32[144,128]{1,0:T(1,128)}', space=vmem, size = 0x12000, scoped, tag = 'internal scratch']
  %s0 = inlined_call_operand.vmem [shape: bf16[256,48], index: 0, kind: input, shape index: {}]
  %s1 = inlined_call_operand.vmem [shape: bf16[48,128], index: 1, kind: input, shape index: {}]
  %s2 = inlined_call_operand.vmem [shape: f32[1,128], index: 2, kind: input, shape index: {}]
  %s3 = inlined_call_operand.vmem [shape: bf16[128,128], index: 3, kind: input, shape index: {}]
  %s4 = inlined_call_operand.vmem [shape: f32[1,128], index: 4, kind: input, shape index: {}]
  %s5 = inlined_call_operand.vmem [shape: bf16[256,128], index: 5, kind: output, shape index: {0}]
  %s6 = inlined_call_operand.vmem [shape: f32[256,128], index: 6, kind: output, shape index: {1}]
  %7 = xla_tuple %s5, %s6
  %s8 = sld [smem:[#allocation0]]
  $region38: #{_forward_arrays.2} parent=0
    _
  %s10 = ssub.s32 1, %s8
  %s11 = scalar_select 0, %s10, %s8
  // Predicated region
  $region2: #{_forward_arrays.2} parent=0 // pred_check
    _
  $region3: #{_forward_arrays.2} parent=0 // pred_check_branch
    %13 = sbr.rel (0) target = $region5
  $region4: #{_forward_arrays.2} parent=0 // pred_region
    _
  $region5: #{_forward_arrays.2} parent=0 // pred_fallthru
    _
  // Predicated region
  $region6: #{_forward_arrays.2} parent=0 // pred_check
    _
  $region7: #{_forward_arrays.2} parent=0 // pred_check_branch
    %15 = sbr.rel (0) target = $region9
  $region8: #{_forward_arrays.2} parent=0 // pred_region
    _
  $region9: #{_forward_arrays.2} parent=0 // pred_fallthru
    _
  // Predicated region
  $region10: #{_forward_arrays.2} parent=0 // pred_check
    _
  $region11: #{_forward_arrays.2} parent=0 // pred_check_branch
    %17 = sbr.rel (0) target = $region13
  $region12: #{_forward_arrays.2} parent=0 // pred_region
    _
  $region13: #{_forward_arrays.2} parent=0 // pred_fallthru
    _
  // Predicated region
  $region14: #{_forward_arrays.2} parent=0 // pred_check
    _
  $region15: #{_forward_arrays.2} parent=0 // pred_check_branch
    %19 = sbr.rel (0) target = $region17
  $region16: #{_forward_arrays.2} parent=0 // pred_region
    _
  $region17: #{_forward_arrays.2} parent=0 // pred_fallthru
    _
  // Predicated region
  $region18: #{_forward_arrays.2} parent=0 // pred_check
    _
  $region19: #{_forward_arrays.2} parent=0 // pred_check_branch
    %21 = sbr.rel (0) target = $region21
  $region20: #{_forward_arrays.2} parent=0 // pred_region
    _
  $region21: #{_forward_arrays.2} parent=0 // pred_fallthru
    _
  %v23 = vld [vmem:[%s0] sm:$0xf]
  %v24 = vld [vmem:[%s0 + $0x4] sm:$0xf]
  %v25 = vld [vmem:[%s0 + $0x8] sm:$0xf]
  %v26 = vld [vmem:[%s0 + $0xc] sm:$0xf]
  %v27 = vld [vmem:[%s0 + $0x10] sm:$0xf]
  %v28 = vld [vmem:[%s0 + $0x14] sm:$0xf]
  %v29 = vld [vmem:[%s0 + $0x18] sm:$0xf]
  %v30 = vld [vmem:[%s0 + $0x1c] sm:$0xf]
  %v31 = vld [vmem:[%s0 + $0x20] sm:$0xf]
  %v32 = vld [vmem:[%s0 + $0x24] sm:$0xf]
  %v33 = vld [vmem:[%s0 + $0x28] sm:$0xf]
  %v34 = vld [vmem:[%s0 + $0x2c] sm:$0xf]
  %v35 = vld [vmem:[%s0 + $0x30] sm:$0xf]
  %v36 = vld [vmem:[%s0 + $0x34] sm:$0xf]
  %v37 = vld [vmem:[%s0 + $0x38] sm:$0xf]
  %v38 = vld [vmem:[%s0 + $0x3c] sm:$0xf]
  %v39 = vld [vmem:[%s0 + $0x40] sm:$0xf]
  %v40 = vld [vmem:[%s0 + $0x44] sm:$0xf]
  %v41 = vld [vmem:[%s0 + $0x48] sm:$0xf]
  %v42 = vld [vmem:[%s0 + $0x4c] sm:$0xf]
  %v43 = vld [vmem:[%s0 + $0x50] sm:$0xf]
  %v44 = vld [vmem:[%s0 + $0x54] sm:$0xf]
  %v45 = vld [vmem:[%s0 + $0x58] sm:$0xf]
  %v46 = vld [vmem:[%s0 + $0x5c] sm:$0xf]
  %v47 = vld [vmem:[%s0 + $0x60] sm:$0xf]
  %v48 = vld [vmem:[%s0 + $0x64] sm:$0xf]
  %v49 = vld [vmem:[%s0 + $0x68] sm:$0xf]
  %v50 = vld [vmem:[%s0 + $0x6c] sm:$0xf]
  %v51 = vld [vmem:[%s0 + $0x70] sm:$0xf]
  %v52 = vld [vmem:[%s0 + $0x74] sm:$0xf]
  %v53 = vld [vmem:[%s0 + $0x78] sm:$0xf]
  %v54 = vld [vmem:[%s0 + $0x7c] sm:$0xf]
  %v55 = vld [vmem:[%s1] sm:$0xf]
  %v56 = vld [vmem:[%s1 + $0x4] sm:$0xf]
  %v57 = vld [vmem:[%s1 + $0x8] sm:$0xf]
  %v58 = vld [vmem:[%s1 + $0xc] sm:$0xf]
  %v59 = vld [vmem:[%s1 + $0x10] sm:$0xf]
  %v60 = vld [vmem:[%s1 + $0x14] sm:$0xf]
  %v61 = vld [vmem:[%s2] sm:$0x1]
  %v63 = vlaneseq
  %v64 = vshrl.u32 %v63, 7
  %v65 = vsub.s32 0, %v64
  %v66 = vrot.slane %v61, %v65
  %v100 = vunpack.c.l.b16 %v23
  %v101 = vunpack.c.l.b16 %v24
  %v102 = vunpack.c.l.b16 %v25
  %v103 = vunpack.c.l.b16 %v26
  %v104 = vunpack.c.l.b16 %v27
  %v105 = vunpack.c.l.b16 %v28
  %v106 = vunpack.c.l.b16 %v29
  %v107 = vunpack.c.l.b16 %v30
  %v108 = vunpack.c.l.b16 %v31
  %v109 = vunpack.c.l.b16 %v32
  %v110 = vunpack.c.l.b16 %v33
  %v111 = vunpack.c.l.b16 %v34
  %v112 = vunpack.c.l.b16 %v35
  %v113 = vunpack.c.l.b16 %v36
  %v114 = vunpack.c.l.b16 %v37
  %v115 = vunpack.c.l.b16 %v38
  %v116 = vunpack.c.l.b16 %v39
  %v117 = vunpack.c.l.b16 %v40
  %v118 = vunpack.c.l.b16 %v41
  %v119 = vunpack.c.l.b16 %v42
  %v120 = vunpack.c.l.b16 %v43
  %v121 = vunpack.c.l.b16 %v44
  %v122 = vunpack.c.l.b16 %v45
  %v123 = vunpack.c.l.b16 %v46
  %v124 = vunpack.c.l.b16 %v47
  %v125 = vunpack.c.l.b16 %v48
  %v126 = vunpack.c.l.b16 %v49
  %v127 = vunpack.c.l.b16 %v50
  %v128 = vunpack.c.l.b16 %v51
  %v129 = vunpack.c.l.b16 %v52
  %v130 = vunpack.c.l.b16 %v53
  %v131 = vunpack.c.l.b16 %v54
  %v132 = vpack.c.b16 %v101, %v100
  %v133 = vpack.c.b16 %v103, %v102
  %v134 = vpack.c.b16 %v105, %v104
  %v135 = vpack.c.b16 %v107, %v106
  %v136 = vpack.c.b16 %v109, %v108
  %v137 = vpack.c.b16 %v111, %v110
  %v138 = vpack.c.b16 %v113, %v112
  %v139 = vpack.c.b16 %v115, %v114
  %v140 = vpack.c.b16 %v117, %v116
  %v141 = vpack.c.b16 %v119, %v118
  %v142 = vpack.c.b16 %v121, %v120
  %v143 = vpack.c.b16 %v123, %v122
  %v144 = vpack.c.b16 %v125, %v124
  %v145 = vpack.c.b16 %v127, %v126
  %v146 = vpack.c.b16 %v129, %v128
  %v147 = vpack.c.b16 %v131, %v130
  %v154 = vunpack.c.l.b16 %v55
  %v155 = vunpack.c.l.b16 %v56
  %v156 = vunpack.c.l.b16 %v57
  %v157 = vunpack.c.l.b16 %v58
  %v158 = vunpack.c.l.b16 %v59
  %v159 = vunpack.c.l.b16 %v60
  %v160 = vpack.c.b16 %v155, %v154
  %v161 = vpack.c.b16 %v157, %v156
  %v162 = vpack.c.b16 %v159, %v158
  %vm166 = vcmask 392192
  %v168 = vsel %vm166, %v132, 0
  %v171 = vsel %vm166, %v133, 0
  %v174 = vsel %vm166, %v134, 0
  %v177 = vsel %vm166, %v135, 0
  %v180 = vsel %vm166, %v136, 0
  %v183 = vsel %vm166, %v137, 0
  %v186 = vsel %vm166, %v138, 0
  %v189 = vsel %vm166, %v139, 0
  %v192 = vsel %vm166, %v140, 0
  %v195 = vsel %vm166, %v141, 0
  %v198 = vsel %vm166, %v142, 0
  %v201 = vsel %vm166, %v143, 0
  %v204 = vsel %vm166, %v144, 0
  %v207 = vsel %vm166, %v145, 0
  %v210 = vsel %vm166, %v146, 0
  %v213 = vsel %vm166, %v147, 0
  %215 = vmatprep.subr.bf16.mxu0 0
  %216 = vmatpush1.bf16.msra.mxu0 0
  %217 = vmatprep.subr.bf16.mxu0 0
  %218 = vmatpush1.bf16.msra.mxu0 0
  %219 = vmatprep.subr.bf16.mxu0 0
  %220 = vmatpush1.bf16.msra.mxu0 0
  %221 = vmatprep.subr.bf16.mxu0 0
  %222 = vmatpush1.bf16.msra.mxu0 0
  %223 = vmatprep.subr.bf16.mxu0 0
  %224 = vmatpush1.bf16.msra.mxu0 0
  %225 = vmatprep.subr.bf16.mxu0 0
  %226 = vmatpush1.bf16.msra.mxu0 %v162
  %227 = vmatprep.subr.bf16.mxu0 0
  %228 = vmatpush1.bf16.msra.mxu0 %v161
  %229 = vmatprep.subr.bf16.mxu0 0
  %230 = vmatpush1.bf16.msra.mxu0 %v160
  %231 = vmatprep.subr.bf16.mxu0 0
  %232 = vmatpush2.bf16.msra.mxu0 0
  %233 = vmatprep.subr.bf16.mxu0 0
  %234 = vmatpush2.bf16.msra.mxu0 0
  %235 = vmatprep.subr.bf16.mxu0 0
  %236 = vmatpush2.bf16.msra.mxu0 0
  %237 = vmatprep.subr.bf16.mxu0 0
  %238 = vmatpush2.bf16.msra.mxu0 0
  %239 = vmatprep.subr.bf16.mxu0 0
  %240 = vmatpush2.bf16.msra.mxu0 0
  %241 = vmatprep.subr.bf16.mxu0 0
  %242 = vmatpush2.bf16.msra.mxu0 0
  %243 = vmatprep.subr.bf16.mxu0 0
  %244 = vmatpush2.bf16.msra.mxu0 0
  %245 = vmatprep.subr.bf16.mxu0 0
  %246 = vmatpush2.bf16.msra.mxu0 0
  %247 = vmatprep.mubr.bf16.mxu0 0
  %248 = vmatmul.mubr.bf16.gmra.mxu0 %v168
  %v249 = vpop.f32.mrf.mxu0
  %v250 = vadd.f32 %v66, %v249
  %v251 = vpop.f32.mrf.mxu0
  %v252 = vpop.f32.mrf.mxu0
  %v253 = vadd.f32 %v66, %v252
  %v254 = vpop.f32.mrf.mxu0
  %255 = vmatprep.mubr.bf16.mxu0 0
  %256 = vmatmul.mubr.bf16.gmra.mxu0 %v171
  %v257 = vpop.f32.mrf.mxu0
  %v258 = vadd.f32 %v66, %v257
  %v259 = vpop.f32.mrf.mxu0
  %v260 = vpop.f32.mrf.mxu0
  %v261 = vadd.f32 %v66, %v260
  %v262 = vpop.f32.mrf.mxu0
  %263 = vmatprep.mubr.bf16.mxu0 0
  %264 = vmatmul.mubr.bf16.gmra.mxu0 %v174
  %v265 = vpop.f32.mrf.mxu0
  %v266 = vadd.f32 %v66, %v265
  %v267 = vpop.f32.mrf.mxu0
  %v268 = vpop.f32.mrf.mxu0
  %v269 = vadd.f32 %v66, %v268
  %v270 = vpop.f32.mrf.mxu0
  %271 = vmatprep.mubr.bf16.mxu0 0
  %272 = vmatmul.mubr.bf16.gmra.mxu0 %v177
  %v273 = vpop.f32.mrf.mxu0
  %v274 = vadd.f32 %v66, %v273
  %v275 = vpop.f32.mrf.mxu0
  %v276 = vpop.f32.mrf.mxu0
  %v277 = vadd.f32 %v66, %v276
  %v278 = vpop.f32.mrf.mxu0
  %279 = vmatprep.mubr.bf16.mxu0 0
  %280 = vmatmul.mubr.bf16.gmra.mxu0 %v180
  %v281 = vpop.f32.mrf.mxu0
  %v282 = vadd.f32 %v66, %v281
  %v283 = vpop.f32.mrf.mxu0
  %v284 = vpop.f32.mrf.mxu0
  %v285 = vadd.f32 %v66, %v284
  %v286 = vpop.f32.mrf.mxu0
  %287 = vmatprep.mubr.bf16.mxu0 0
  %288 = vmatmul.mubr.bf16.gmra.mxu0 %v183
  %v289 = vpop.f32.mrf.mxu0
  %v290 = vadd.f32 %v66, %v289
  %v291 = vpop.f32.mrf.mxu0
  %v292 = vpop.f32.mrf.mxu0
  %v293 = vadd.f32 %v66, %v292
  %v294 = vpop.f32.mrf.mxu0
  %295 = vmatprep.mubr.bf16.mxu0 0
  %296 = vmatmul.mubr.bf16.gmra.mxu0 %v186
  %v297 = vpop.f32.mrf.mxu0
  %v298 = vadd.f32 %v66, %v297
  %v299 = vpop.f32.mrf.mxu0
  %v300 = vpop.f32.mrf.mxu0
  %v301 = vadd.f32 %v66, %v300
  %v302 = vpop.f32.mrf.mxu0
  %303 = vmatprep.mubr.bf16.mxu0 0
  %304 = vmatmul.mubr.bf16.gmra.mxu0 %v189
  %v305 = vpop.f32.mrf.mxu0
  %v306 = vadd.f32 %v66, %v305
  %v307 = vpop.f32.mrf.mxu0
  %v308 = vpop.f32.mrf.mxu0
  %v309 = vadd.f32 %v66, %v308
  %v310 = vpop.f32.mrf.mxu0
  %311 = vmatprep.mubr.bf16.mxu0 0
  %312 = vmatmul.mubr.bf16.gmra.mxu0 %v192
  %v313 = vpop.f32.mrf.mxu0
  %v314 = vadd.f32 %v66, %v313
  %v315 = vpop.f32.mrf.mxu0
  %v316 = vpop.f32.mrf.mxu0
  %v317 = vadd.f32 %v66, %v316
  %v318 = vpop.f32.mrf.mxu0
  %319 = vmatprep.mubr.bf16.mxu0 0
  %320 = vmatmul.mubr.bf16.gmra.mxu0 %v195
  %v321 = vpop.f32.mrf.mxu0
  %v322 = vadd.f32 %v66, %v321
  %v323 = vpop.f32.mrf.mxu0
  %v324 = vpop.f32.mrf.mxu0
  %v325 = vadd.f32 %v66, %v324
  %v326 = vpop.f32.mrf.mxu0
  %327 = vmatprep.mubr.bf16.mxu0 0
  %328 = vmatmul.mubr.bf16.gmra.mxu0 %v198
  %v329 = vpop.f32.mrf.mxu0
  %v330 = vadd.f32 %v66, %v329
  %v331 = vpop.f32.mrf.mxu0
  %v332 = vpop.f32.mrf.mxu0
  %v333 = vadd.f32 %v66, %v332
  %v334 = vpop.f32.mrf.mxu0
  %335 = vmatprep.mubr.bf16.mxu0 0
  %336 = vmatmul.mubr.bf16.gmra.mxu0 %v201
  %v337 = vpop.f32.mrf.mxu0
  %v338 = vadd.f32 %v66, %v337
  %v339 = vpop.f32.mrf.mxu0
  %v340 = vpop.f32.mrf.mxu0
  %v341 = vadd.f32 %v66, %v340
  %v342 = vpop.f32.mrf.mxu0
  %343 = vmatprep.mubr.bf16.mxu0 0
  %344 = vmatmul.mubr.bf16.gmra.mxu0 %v204
  %v345 = vpop.f32.mrf.mxu0
  %v346 = vadd.f32 %v66, %v345
  %v347 = vpop.f32.mrf.mxu0
  %v348 = vpop.f32.mrf.mxu0
  %v349 = vadd.f32 %v66, %v348
  %v350 = vpop.f32.mrf.mxu0
  %351 = vmatprep.mubr.bf16.mxu0 0
  %352 = vmatmul.mubr.bf16.gmra.mxu0 %v207
  %v353 = vpop.f32.mrf.mxu0
  %v354 = vadd.f32 %v66, %v353
  %v355 = vpop.f32.mrf.mxu0
  %v356 = vpop.f32.mrf.mxu0
  %v357 = vadd.f32 %v66, %v356
  %v358 = vpop.f32.mrf.mxu0
  %359 = vmatprep.mubr.bf16.mxu0 0
  %360 = vmatmul.mubr.bf16.gmra.mxu0 %v210
  %v361 = vpop.f32.mrf.mxu0
  %v362 = vadd.f32 %v66, %v361
  %v363 = vpop.f32.mrf.mxu0
  %v364 = vpop.f32.mrf.mxu0
  %v365 = vadd.f32 %v66, %v364
  %v366 = vpop.f32.mrf.mxu0
  %367 = vmatprep.mubr.bf16.mxu0 0
  %368 = vmatmul.mubr.bf16.gmra.mxu0 %v213
  %v369 = vpop.f32.mrf.mxu0
  %v370 = vadd.f32 %v66, %v369
  %v371 = vpop.f32.mrf.mxu0
  %v372 = vpop.f32.mrf.mxu0
  %v373 = vadd.f32 %v66, %v372
  %v374 = vpop.f32.mrf.mxu0
  %375 = vdwg.mxu0
  %v376 = vpack.c.bf16 %v253, %v250
  %v377 = vpack.c.bf16 %v261, %v258
  %v378 = vpack.c.bf16 %v269, %v266
  %v379 = vpack.c.bf16 %v277, %v274
  %v380 = vpack.c.bf16 %v285, %v282
  %v381 = vpack.c.bf16 %v293, %v290
  %v382 = vpack.c.bf16 %v301, %v298
  %v383 = vpack.c.bf16 %v309, %v306
  %v384 = vpack.c.bf16 %v317, %v314
  %v385 = vpack.c.bf16 %v325, %v322
  %v386 = vpack.c.bf16 %v333, %v330
  %v387 = vpack.c.bf16 %v341, %v338
  %v388 = vpack.c.bf16 %v349, %v346
  %v389 = vpack.c.bf16 %v357, %v354
  %v390 = vpack.c.bf16 %v365, %v362
  %v391 = vpack.c.bf16 %v373, %v370
  %v408 = vunpack.c.l.b16 %v376
  %v409 = vunpack.c.h.b16 %v376
  %v410 = vunpack.c.l.b16 %v377
  %v411 = vunpack.c.h.b16 %v377
  %v412 = vunpack.c.l.b16 %v378
  %v413 = vunpack.c.h.b16 %v378
  %v414 = vunpack.c.l.b16 %v379
  %v415 = vunpack.c.h.b16 %v379
  %v416 = vunpack.c.l.b16 %v380
  %v417 = vunpack.c.h.b16 %v380
  %v418 = vunpack.c.l.b16 %v381
  %v419 = vunpack.c.h.b16 %v381
  %v420 = vunpack.c.l.b16 %v382
  %v421 = vunpack.c.h.b16 %v382
  %v422 = vunpack.c.l.b16 %v383
  %v423 = vunpack.c.h.b16 %v383
  %v424 = vunpack.c.l.b16 %v384
  %v425 = vunpack.c.h.b16 %v384
  %v426 = vunpack.c.l.b16 %v385
  %v427 = vunpack.c.h.b16 %v385
  %v428 = vunpack.c.l.b16 %v386
  %v429 = vunpack.c.h.b16 %v386
  %v430 = vunpack.c.l.b16 %v387
  %v431 = vunpack.c.h.b16 %v387
  %v432 = vunpack.c.l.b16 %v388
  %v433 = vunpack.c.h.b16 %v388
  %v434 = vunpack.c.l.b16 %v389
  %v435 = vunpack.c.h.b16 %v389
  %v436 = vunpack.c.l.b16 %v390
  %v437 = vunpack.c.h.b16 %v390
  %v438 = vunpack.c.l.b16 %v391
  %v439 = vunpack.c.h.b16 %v391
  %v440 = vpack.c.b16 %v408, %v408
  %v441 = vpack.c.b16 %v409, %v409
  %v442 = vpack.c.b16 %v410, %v410
  %v443 = vpack.c.b16 %v411, %v411
  %v444 = vpack.c.b16 %v412, %v412
  %v445 = vpack.c.b16 %v413, %v413
  %v446 = vpack.c.b16 %v414, %v414
  %v447 = vpack.c.b16 %v415, %v415
  %v448 = vpack.c.b16 %v416, %v416
  %v449 = vpack.c.b16 %v417, %v417
  %v450 = vpack.c.b16 %v418, %v418
  %v451 = vpack.c.b16 %v419, %v419
  %v452 = vpack.c.b16 %v420, %v420
  %v453 = vpack.c.b16 %v421, %v421
  %v454 = vpack.c.b16 %v422, %v422
  %v455 = vpack.c.b16 %v423, %v423
  %v456 = vpack.c.b16 %v424, %v424
  %v457 = vpack.c.b16 %v425, %v425
  %v458 = vpack.c.b16 %v426, %v426
  %v459 = vpack.c.b16 %v427, %v427
  %v460 = vpack.c.b16 %v428, %v428
  %v461 = vpack.c.b16 %v429, %v429
  %v462 = vpack.c.b16 %v430, %v430
  %v463 = vpack.c.b16 %v431, %v431
  %v464 = vpack.c.b16 %v432, %v432
  %v465 = vpack.c.b16 %v433, %v433
  %v466 = vpack.c.b16 %v434, %v434
  %v467 = vpack.c.b16 %v435, %v435
  %v468 = vpack.c.b16 %v436, %v436
  %v469 = vpack.c.b16 %v437, %v437
  %v470 = vpack.c.b16 %v438, %v438
  %v471 = vpack.c.b16 %v439, %v439
  %504 = vst [vmem:[%s5] sm:$0xf] %v440
  %505 = vst [vmem:[%s5 + $0x4] sm:$0xf] %v441
  %506 = vst [vmem:[%s5 + $0x8] sm:$0xf] %v442
  %507 = vst [vmem:[%s5 + $0xc] sm:$0xf] %v443
  %508 = vst [vmem:[%s5 + $0x10] sm:$0xf] %v444
  %509 = vst [vmem:[%s5 + $0x14] sm:$0xf] %v445
  %510 = vst [vmem:[%s5 + $0x18] sm:$0xf] %v446
  %511 = vst [vmem:[%s5 + $0x1c] sm:$0xf] %v447
  %512 = vst [vmem:[%s5 + $0x20] sm:$0xf] %v448
  %513 = vst [vmem:[%s5 + $0x24] sm:$0xf] %v449
  %514 = vst [vmem:[%s5 + $0x28] sm:$0xf] %v450
  %515 = vst [vmem:[%s5 + $0x2c] sm:$0xf] %v451
  %516 = vst [vmem:[%s5 + $0x30] sm:$0xf] %v452
  %517 = vst [vmem:[%s5 + $0x34] sm:$0xf] %v453
  %518 = vst [vmem:[%s5 + $0x38] sm:$0xf] %v454
  %519 = vst [vmem:[%s5 + $0x3c] sm:$0xf] %v455
  %520 = vst [vmem:[%s5 + $0x40] sm:$0xf] %v456
  %521 = vst [vmem:[%s5 + $0x44] sm:$0xf] %v457
  %522 = vst [vmem:[%s5 + $0x48] sm:$0xf] %v458
  %523 = vst [vmem:[%s5 + $0x4c] sm:$0xf] %v459
  %524 = vst [vmem:[%s5 + $0x50] sm:$0xf] %v460
  %525 = vst [vmem:[%s5 + $0x54] sm:$0xf] %v461
  %526 = vst [vmem:[%s5 + $0x58] sm:$0xf] %v462
  %527 = vst [vmem:[%s5 + $0x5c] sm:$0xf] %v463
  %528 = vst [vmem:[%s5 + $0x60] sm:$0xf] %v464
  %529 = vst [vmem:[%s5 + $0x64] sm:$0xf] %v465
  %530 = vst [vmem:[%s5 + $0x68] sm:$0xf] %v466
  %531 = vst [vmem:[%s5 + $0x6c] sm:$0xf] %v467
  %532 = vst [vmem:[%s5 + $0x70] sm:$0xf] %v468
  %533 = vst [vmem:[%s5 + $0x74] sm:$0xf] %v469
  %534 = vst [vmem:[%s5 + $0x78] sm:$0xf] %v470
  %535 = vst [vmem:[%s5 + $0x7c] sm:$0xf] %v471
  %v536 = vld [vmem:[%s3] sm:$0xf]
  %v537 = vld [vmem:[%s3 + $0x4] sm:$0xf]
  %v538 = vld [vmem:[%s3 + $0x8] sm:$0xf]
  %v539 = vld [vmem:[%s3 + $0xc] sm:$0xf]
  %v540 = vld [vmem:[%s3 + $0x10] sm:$0xf]
  %v541 = vld [vmem:[%s3 + $0x14] sm:$0xf]
  %v542 = vld [vmem:[%s3 + $0x18] sm:$0xf]
  %v543 = vld [vmem:[%s3 + $0x1c] sm:$0xf]
  %v544 = vld [vmem:[%s3 + $0x20] sm:$0xf]
  %v545 = vld [vmem:[%s3 + $0x24] sm:$0xf]
  %v546 = vld [vmem:[%s3 + $0x28] sm:$0xf]
  %v547 = vld [vmem:[%s3 + $0x2c] sm:$0xf]
  %v548 = vld [vmem:[%s3 + $0x30] sm:$0xf]
  %v549 = vld [vmem:[%s3 + $0x34] sm:$0xf]
  %v550 = vld [vmem:[%s3 + $0x38] sm:$0xf]
  %v551 = vld [vmem:[%s3 + $0x3c] sm:$0xf]
  %v552 = vld [vmem:[%s4] sm:$0x1]
  %v554 = vlaneseq
  %v555 = vshrl.u32 %v554, 7
  %v556 = vsub.s32 0, %v555
  %v557 = vrot.slane %v552, %v556
  %v575 = vunpack.c.l.b16 %v536
  %v576 = vunpack.c.l.b16 %v537
  %v577 = vunpack.c.l.b16 %v538
  %v578 = vunpack.c.l.b16 %v539
  %v579 = vunpack.c.l.b16 %v540
  %v580 = vunpack.c.l.b16 %v541
  %v581 = vunpack.c.l.b16 %v542
  %v582 = vunpack.c.l.b16 %v543
  %v583 = vunpack.c.l.b16 %v544
  %v584 = vunpack.c.l.b16 %v545
  %v585 = vunpack.c.l.b16 %v546
  %v586 = vunpack.c.l.b16 %v547
  %v587 = vunpack.c.l.b16 %v548
  %v588 = vunpack.c.l.b16 %v549
  %v589 = vunpack.c.l.b16 %v550
  %v590 = vunpack.c.l.b16 %v551
  %v591 = vpack.c.b16 %v576, %v575
  %v592 = vpack.c.b16 %v578, %v577
  %v593 = vpack.c.b16 %v580, %v579
  %v594 = vpack.c.b16 %v582, %v581
  %v595 = vpack.c.b16 %v584, %v583
  %v596 = vpack.c.b16 %v586, %v585
  %v597 = vpack.c.b16 %v588, %v587
  %v598 = vpack.c.b16 %v590, %v589
  %607 = vmatprep.subr.bf16.mxu0 0
  %608 = vmatpush1.bf16.msra.mxu0 %v598
  %609 = vmatprep.subr.bf16.mxu0 0
  %610 = vmatpush1.bf16.msra.mxu0 %v597
  %611 = vmatprep.subr.bf16.mxu0 0
  %612 = vmatpush1.bf16.msra.mxu0 %v596
  %613 = vmatprep.subr.bf16.mxu0 0
  %614 = vmatpush1.bf16.msra.mxu0 %v595
  %615 = vmatprep.subr.bf16.mxu0 0
  %616 = vmatpush1.bf16.msra.mxu0 %v594
  %617 = vmatprep.subr.bf16.mxu0 0
  %618 = vmatpush1.bf16.msra.mxu0 %v593
  %619 = vmatprep.subr.bf16.mxu0 0
  %620 = vmatpush1.bf16.msra.mxu0 %v592
  %621 = vmatprep.subr.bf16.mxu0 0
  %622 = vmatpush1.bf16.msra.mxu0 %v591
  %623 = vmatprep.subr.bf16.mxu0 0
  %624 = vmatpush2.bf16.msra.mxu0 0
  %625 = vmatprep.subr.bf16.mxu0 0
  %626 = vmatpush2.bf16.msra.mxu0 0
  %627 = vmatprep.subr.bf16.mxu0 0
  %628 = vmatpush2.bf16.msra.mxu0 0
  %629 = vmatprep.subr.bf16.mxu0 0
  %630 = vmatpush2.bf16.msra.mxu0 0
  %631 = vmatprep.subr.bf16.mxu0 0
  %632 = vmatpush2.bf16.msra.mxu0 0
  %633 = vmatprep.subr.bf16.mxu0 0
  %634 = vmatpush2.bf16.msra.mxu0 0
  %635 = vmatprep.subr.bf16.mxu0 0
  %636 = vmatpush2.bf16.msra.mxu0 0
  %637 = vmatprep.subr.bf16.mxu0 0
  %638 = vmatpush2.bf16.msra.mxu0 0
  %639 = vmatprep.mubr.bf16.mxu0 0
  %640 = vmatmul.mubr.bf16.gmra.mxu0 %v376
  %v641 = vpop.f32.mrf.mxu0
  %v642 = vadd.f32 %v557, %v641
  %v643 = vpop.f32.mrf.mxu0
  %v644 = vpop.f32.mrf.mxu0
  %v645 = vadd.f32 %v557, %v644
  %v646 = vpop.f32.mrf.mxu0
  %647 = vmatprep.mubr.bf16.mxu0 0
  %648 = vmatmul.mubr.bf16.gmra.mxu0 %v377
  %v649 = vpop.f32.mrf.mxu0
  %v650 = vadd.f32 %v557, %v649
  %v651 = vpop.f32.mrf.mxu0
  %v652 = vpop.f32.mrf.mxu0
  %v653 = vadd.f32 %v557, %v652
  %v654 = vpop.f32.mrf.mxu0
  %655 = vmatprep.mubr.bf16.mxu0 0
  %656 = vmatmul.mubr.bf16.gmra.mxu0 %v378
  %v657 = vpop.f32.mrf.mxu0
  %v658 = vadd.f32 %v557, %v657
  %v659 = vpop.f32.mrf.mxu0
  %v660 = vpop.f32.mrf.mxu0
  %v661 = vadd.f32 %v557, %v660
  %v662 = vpop.f32.mrf.mxu0
  %663 = vmatprep.mubr.bf16.mxu0 0
  %664 = vmatmul.mubr.bf16.gmra.mxu0 %v379
  %v665 = vpop.f32.mrf.mxu0
  %v666 = vadd.f32 %v557, %v665
  %v667 = vpop.f32.mrf.mxu0
  %v668 = vpop.f32.mrf.mxu0
  %v669 = vadd.f32 %v557, %v668
  %v670 = vpop.f32.mrf.mxu0
  %671 = vmatprep.mubr.bf16.mxu0 0
  %672 = vmatmul.mubr.bf16.gmra.mxu0 %v380
  %v673 = vpop.f32.mrf.mxu0
  %v674 = vadd.f32 %v557, %v673
  %v675 = vpop.f32.mrf.mxu0
  %v676 = vpop.f32.mrf.mxu0
  %v677 = vadd.f32 %v557, %v676
  %v678 = vpop.f32.mrf.mxu0
  %679 = vmatprep.mubr.bf16.mxu0 0
  %680 = vmatmul.mubr.bf16.gmra.mxu0 %v381
  %v681 = vpop.f32.mrf.mxu0
  %v682 = vadd.f32 %v557, %v681
  %v683 = vpop.f32.mrf.mxu0
  %v684 = vpop.f32.mrf.mxu0
  %v685 = vadd.f32 %v557, %v684
  %v686 = vpop.f32.mrf.mxu0
  %687 = vmatprep.mubr.bf16.mxu0 0
  %688 = vmatmul.mubr.bf16.gmra.mxu0 %v382
  %v689 = vpop.f32.mrf.mxu0
  %v690 = vadd.f32 %v557, %v689
  %v691 = vpop.f32.mrf.mxu0
  %v692 = vpop.f32.mrf.mxu0
  %v693 = vadd.f32 %v557, %v692
  %v694 = vpop.f32.mrf.mxu0
  %695 = vmatprep.mubr.bf16.mxu0 0
  %696 = vmatmul.mubr.bf16.gmra.mxu0 %v383
  %v697 = vpop.f32.mrf.mxu0
  %v698 = vadd.f32 %v557, %v697
  %v699 = vpop.f32.mrf.mxu0
  %v700 = vpop.f32.mrf.mxu0
  %v701 = vadd.f32 %v557, %v700
  %v702 = vpop.f32.mrf.mxu0
  %703 = vmatprep.mubr.bf16.mxu0 0
  %704 = vmatmul.mubr.bf16.gmra.mxu0 %v384
  %v705 = vpop.f32.mrf.mxu0
  %v706 = vadd.f32 %v557, %v705
  %v707 = vpop.f32.mrf.mxu0
  %v708 = vpop.f32.mrf.mxu0
  %v709 = vadd.f32 %v557, %v708
  %v710 = vpop.f32.mrf.mxu0
  %711 = vmatprep.mubr.bf16.mxu0 0
  %712 = vmatmul.mubr.bf16.gmra.mxu0 %v385
  %v713 = vpop.f32.mrf.mxu0
  %v714 = vadd.f32 %v557, %v713
  %v715 = vpop.f32.mrf.mxu0
  %v716 = vpop.f32.mrf.mxu0
  %v717 = vadd.f32 %v557, %v716
  %v718 = vpop.f32.mrf.mxu0
  %719 = vmatprep.mubr.bf16.mxu0 0
  %720 = vmatmul.mubr.bf16.gmra.mxu0 %v386
  %v721 = vpop.f32.mrf.mxu0
  %v722 = vadd.f32 %v557, %v721
  %v723 = vpop.f32.mrf.mxu0
  %v724 = vpop.f32.mrf.mxu0
  %v725 = vadd.f32 %v557, %v724
  %v726 = vpop.f32.mrf.mxu0
  %727 = vmatprep.mubr.bf16.mxu0 0
  %728 = vmatmul.mubr.bf16.gmra.mxu0 %v387
  %v729 = vpop.f32.mrf.mxu0
  %v730 = vadd.f32 %v557, %v729
  %v731 = vpop.f32.mrf.mxu0
  %v732 = vpop.f32.mrf.mxu0
  %v733 = vadd.f32 %v557, %v732
  %v734 = vpop.f32.mrf.mxu0
  %735 = vmatprep.mubr.bf16.mxu0 0
  %736 = vmatmul.mubr.bf16.gmra.mxu0 %v388
  %v737 = vpop.f32.mrf.mxu0
  %v738 = vadd.f32 %v557, %v737
  %v739 = vpop.f32.mrf.mxu0
  %v740 = vpop.f32.mrf.mxu0
  %v741 = vadd.f32 %v557, %v740
  %v742 = vpop.f32.mrf.mxu0
  %743 = vmatprep.mubr.bf16.mxu0 0
  %744 = vmatmul.mubr.bf16.gmra.mxu0 %v389
  %v745 = vpop.f32.mrf.mxu0
  %v746 = vadd.f32 %v557, %v745
  %v747 = vpop.f32.mrf.mxu0
  %v748 = vpop.f32.mrf.mxu0
  %v749 = vadd.f32 %v557, %v748
  %v750 = vpop.f32.mrf.mxu0
  %751 = vmatprep.mubr.bf16.mxu0 0
  %752 = vmatmul.mubr.bf16.gmra.mxu0 %v390
  %v753 = vpop.f32.mrf.mxu0
  %v754 = vadd.f32 %v557, %v753
  %v755 = vpop.f32.mrf.mxu0
  %v756 = vpop.f32.mrf.mxu0
  %v757 = vadd.f32 %v557, %v756
  %v758 = vpop.f32.mrf.mxu0
  %759 = vmatprep.mubr.bf16.mxu0 0
  %760 = vmatmul.mubr.bf16.gmra.mxu0 %v391
  %v761 = vpop.f32.mrf.mxu0
  %v762 = vadd.f32 %v557, %v761
  %v763 = vpop.f32.mrf.mxu0
  %v764 = vpop.f32.mrf.mxu0
  %v765 = vadd.f32 %v557, %v764
  %v766 = vpop.f32.mrf.mxu0
  %767 = vdwg.mxu0
  %768 = vst [vmem:[%s6] sm:$0xff] %v642
  %769 = vst [vmem:[%s6 + $0x8] sm:$0xff] %v645
  %770 = vst [vmem:[%s6 + $0x10] sm:$0xff] %v650
  %771 = vst [vmem:[%s6 + $0x18] sm:$0xff] %v653
  %772 = vst [vmem:[%s6 + $0x20] sm:$0xff] %v658
  %773 = vst [vmem:[%s6 + $0x28] sm:$0xff] %v661
  %774 = vst [vmem:[%s6 + $0x30] sm:$0xff] %v666
  %775 = vst [vmem:[%s6 + $0x38] sm:$0xff] %v669
  %776 = vst [vmem:[%s6 + $0x40] sm:$0xff] %v674
  %777 = vst [vmem:[%s6 + $0x48] sm:$0xff] %v677
  %778 = vst [vmem:[%s6 + $0x50] sm:$0xff] %v682
  %779 = vst [vmem:[%s6 + $0x58] sm:$0xff] %v685
  %780 = vst [vmem:[%s6 + $0x60] sm:$0xff] %v690
  %781 = vst [vmem:[%s6 + $0x68] sm:$0xff] %v693
  %782 = vst [vmem:[%s6 + $0x70] sm:$0xff] %v698
  %783 = vst [vmem:[%s6 + $0x78] sm:$0xff] %v701
  %784 = vst [vmem:[%s6 + $0x80] sm:$0xff] %v706
  %785 = vst [vmem:[%s6 + $0x88] sm:$0xff] %v709
  %786 = vst [vmem:[%s6 + $0x90] sm:$0xff] %v714
  %787 = vst [vmem:[%s6 + $0x98] sm:$0xff] %v717
  %788 = vst [vmem:[%s6 + $0xa0] sm:$0xff] %v722
  %789 = vst [vmem:[%s6 + $0xa8] sm:$0xff] %v725
  %790 = vst [vmem:[%s6 + $0xb0] sm:$0xff] %v730
  %791 = vst [vmem:[%s6 + $0xb8] sm:$0xff] %v733
  %792 = vst [vmem:[%s6 + $0xc0] sm:$0xff] %v738
  %793 = vst [vmem:[%s6 + $0xc8] sm:$0xff] %v741
  %794 = vst [vmem:[%s6 + $0xd0] sm:$0xff] %v746
  %795 = vst [vmem:[%s6 + $0xd8] sm:$0xff] %v749
  %796 = vst [vmem:[%s6 + $0xe0] sm:$0xff] %v754
  %797 = vst [vmem:[%s6 + $0xe8] sm:$0xff] %v757
  %798 = vst [vmem:[%s6 + $0xf0] sm:$0xff] %v762
  %799 = vst [vmem:[%s6 + $0xf8] sm:$0xff] %v765
  // Predicated region
  $region22: #{_forward_arrays.2} parent=0 // pred_check
    _
  $region23: #{_forward_arrays.2} parent=0 // pred_check_branch
    %801 = sbr.rel (0) target = $region25
  $region24: #{_forward_arrays.2} parent=0 // pred_region
    _
  $region25: #{_forward_arrays.2} parent=0 // pred_fallthru
    _
  // Predicated region
  $region26: #{_forward_arrays.2} parent=0 // pred_check
    _
  $region27: #{_forward_arrays.2} parent=0 // pred_check_branch
    %803 = sbr.rel (0) target = $region29
  $region28: #{_forward_arrays.2} parent=0 // pred_region
    _
  $region29: #{_forward_arrays.2} parent=0 // pred_fallthru
    _
  // Predicated region
  $region30: #{_forward_arrays.2} parent=0 // pred_check
    _
  $region31: #{_forward_arrays.2} parent=0 // pred_check_branch
    %805 = sbr.rel (0) target = $region33
  $region32: #{_forward_arrays.2} parent=0 // pred_region
    _
  $region33: #{_forward_arrays.2} parent=0 // pred_fallthru
    _
  // Predicated region
  $region34: #{_forward_arrays.2} parent=0 // pred_check
    _
  $region35: #{_forward_arrays.2} parent=0 // pred_check_branch
    %807 = sbr.rel (0) target = $region37
  $region36: #{_forward_arrays.2} parent=0 // pred_region
    _
  $region37: #{_forward_arrays.2} parent=0 // pred_fallthru
    _

</llo_original>
